<compile_context>
chip_gen: v7x
topology: tpu7x:2x2x1
jax: 0.10.0
libtpu: 0.0.40
codegen_flags: <defaults>
</compile_context>

<pallas_src>
import math

import jax
import jax.numpy as jnp
from jax import lax
from jax.experimental import pallas as pl
from jax.experimental.pallas import tpu as pltpu

# ---- model dims (small, consistent with the module's structure) ----
B = 2            # batch
S = 16           # sequence length
D = 64           # d_model
NH = 4           # nheads
DK = D // NH     # head dim
MLP = 128        # mlp_hidden_dim
EPS = 1e-5       # nn.LayerNorm default eps
SCALE = 1.0 / math.sqrt(DK)   # = 0.25, exact power of two -> folding into Wq is exact

BF = jnp.bfloat16
F32 = jnp.float32


def encoder_block_kernel(x_ref, wq_ref, wkvt_ref, wo_ref, w1_ref, w2_ref,
                         b1_ref, vec_ref, o_ref):
    """One grid step == one batch element (S, D); weights resident in VMEM across steps.

    vec_ref rows: 0=bo, 1=gamma1, 2=beta1, 3=b2, 4=gamma2, 5=beta2 (all width D).
    """
    x = x_ref[0]                              # (S, D) f32
    x_bf = x.astype(BF)

    # --- projections: Q row-major, K/V transposed (heads land on the sublane axis) ---
    # q[s, j]   = sum_d x[s, d] * (Wq*scale)[d, j]
    q = jnp.dot(x_bf, wq_ref[...], preferred_element_type=F32)          # (S, D)
    # kv_t[j,s] = sum_d Wkv[d, j] * x[s, d]   -> rows [0:D)=K^T, [D:2D)=V^T
    kv_t = lax.dot_general(wkvt_ref[...], x_bf,
                           dimension_numbers=(((1,), (1,)), ((), ())),
                           preferred_element_type=F32)                   # (2D, S)

    # --- multi-head attention; K/V head slices are tile-aligned row slices ---
    heads = []
    for h in range(NH):                        # static loop, static slices
        c = h * DK
        qh = q[:, c:c + DK].astype(BF)                        # (S, DK)  (only lane slices left)
        kh_t = kv_t[c:c + DK, :].astype(BF)                   # (DK, S)  pre-transposed K
        vh_t = kv_t[D + c:D + c + DK, :]                      # (DK, S)  pre-transposed V

        # scores[i, j] = sum_d q[i, d] * k[j, d]   (scale already folded into Wq)
        s = jnp.dot(qh, kh_t, preferred_element_type=F32)     # (S, S), no RHS transpose
        s = s - jnp.max(s, axis=-1, keepdims=True)
        p = jnp.exp(s)
        p = p * pl.reciprocal(jnp.sum(p, axis=-1, keepdims=True), approx=True)

        # out_h[i, d] = sum_j p[i, j] * v[j, d]  -> contract last dims, no vxpose
        oh = lax.dot_general(p.astype(BF), vh_t.astype(BF),
                             dimension_numbers=(((1,), (1,)), ((), ())),
                             preferred_element_type=F32)      # (S, DK)
        heads.append(oh)

    # head h occupies lanes [h*DK, (h+1)*DK) -> single output-projection matmul after
    attn_heads = jnp.concatenate(heads, axis=-1)              # (S, D)
    bo = vec_ref[0:1, :]
    attn = jnp.dot(attn_heads.astype(BF), wo_ref[...],
                   preferred_element_type=F32) + bo           # (S, D)

    # --- norm1(query + attention), f32 ---
    g1, be1 = vec_ref[1:2, :], vec_ref[2:3, :]
    h1 = x + attn
    mu1 = jnp.mean(h1, axis=-1, keepdims=True)
    var1 = jnp.mean((h1 - mu1) ** 2, axis=-1, keepdims=True)
    xn = (h1 - mu1) * lax.rsqrt(var1 + EPS) * g1 + be1

    # --- feed-forward: fc2(ReLU(fc1(xn))), bf16 matmuls with f32 accumulation ---
    f = jnp.dot(xn.astype(BF), w1_ref[...], preferred_element_type=F32) + b1_ref[...]
    f = jnp.maximum(f, 0.0)
    f = jnp.dot(f.astype(BF), w2_ref[...], preferred_element_type=F32) + vec_ref[3:4, :]

    # --- norm2(forward + x), f32 ---
    g2, be2 = vec_ref[4:5, :], vec_ref[5:6, :]
    h2 = f + xn
    mu2 = jnp.mean(h2, axis=-1, keepdims=True)
    var2 = jnp.mean((h2 - mu2) ** 2, axis=-1, keepdims=True)
    out = (h2 - mu2) * lax.rsqrt(var2 + EPS) * g2 + be2

    o_ref[0] = out.astype(o_ref.dtype)


def prepare_params(params):
    """One-time parameter preprocessing (hoisted out of the per-call forward).

    * attention scale folded into Wq; Wq kept row-major (matmul LHS is the activation).
    * Wk/Wv fused and transposed to (2D, D) so the kernel's K/V projection yields per-head
      rows on the sublane axis (tile-aligned slices, K/V pre-transposed for attention).
    * matmul weights cast to bf16; biases / LayerNorm params stay f32.
    * the six (1, D) vectors packed into one (6, D) slab (fewer DMA descriptors).
    """
    (wq, wk, wv, wo, bo, w1, b1, w2, b2, g1, be1, g2, be2) = params
    wq_s = (wq * SCALE).astype(BF)                                    # (D, D)
    wkv_t = jnp.concatenate([wk, wv], axis=1).T.astype(BF)            # (2D, D)
    vec = jnp.concatenate([bo, g1, be1, b2, g2, be2], axis=0)         # (6, D) f32
    return (wq_s, wkv_t, wo.astype(BF), w1.astype(BF), w2.astype(BF), b1, vec)


def encoder_block(x, prepped):
    wq_s, wkv_t, wo, w1, w2, b1, vec = prepped
    Bx, Sx, Dx = x.shape

    # advisory cost estimate for XLA scheduling around the custom call
    flops = int(2 * Bx * Sx * Dx * (3 * Dx)            # QKV projections
                + 2 * Bx * NH * (2 * Sx * Sx * DK)     # qk^T and p@v
                + 2 * Bx * Sx * Dx * Dx                # output projection
                + 2 * 2 * Bx * Sx * Dx * MLP)          # fc1 + fc2
    transcendentals = int(Bx * NH * Sx * Sx + Bx * NH * Sx + 2 * Bx * Sx)
    bytes_accessed = int(x.nbytes + wq_s.nbytes + wkv_t.nbytes + wo.nbytes
                         + w1.nbytes + w2.nbytes + b1.nbytes + vec.nbytes + x.nbytes)

    def wspec(shape):
        # full-array weight block, same block every grid step -> stays VMEM-resident
        return pl.BlockSpec(shape, lambda b: (0, 0))

    out = pl.pallas_call(
        encoder_block_kernel,
        out_shape=jax.ShapeDtypeStruct((Bx, Sx, Dx), x.dtype),
        grid=(Bx,),
        in_specs=[
            pl.BlockSpec((1, Sx, Dx), lambda b: (b, 0, 0)),   # x: one batch per grid step
            wspec(wq_s.shape),
            wspec(wkv_t.shape),
            wspec(wo.shape),
            wspec(w1.shape),
            wspec(w2.shape),
            wspec(b1.shape),
            wspec(vec.shape),
        ],
        out_specs=pl.BlockSpec((1, Sx, Dx), lambda b: (b, 0, 0)),
        compiler_params=pltpu.CompilerParams(
            dimension_semantics=("parallel",)),                # batch across TCs (2x on v7x)
        cost_estimate=pl.CostEstimate(flops=flops,
                                      transcendentals=transcendentals,
                                      bytes_accessed=bytes_accessed),
    )(x, wq_s, wkv_t, wo, w1, w2, b1, vec)
    return out


def encoder_block_ref(x, params):
    """Pure-JAX f32 reference mirroring the PyTorch forward, for verification."""
    (wq, wk, wv, wo, bo, w1, b1, w2, b2, g1, be1, g2, be2) = params
    q = x @ wq
    k = x @ wk
    v = x @ wv
    qh = q.reshape(B, S, NH, DK)
    kh = k.reshape(B, S, NH, DK)
    vh = v.reshape(B, S, NH, DK)
    scores = jnp.einsum('nqhd,nkhd->nhqk', qh, kh) * SCALE
    scores = jax.nn.softmax(scores, axis=-1)
    out = jnp.einsum('nhql,nlhd->nqhd', scores, vh).reshape(B, S, D)
    attn = out @ wo + bo[0]

    def ln(h, g, be):
        mu = jnp.mean(h, axis=-1, keepdims=True)
        var = jnp.mean((h - mu) ** 2, axis=-1, keepdims=True)
        return (h - mu) / jnp.sqrt(var + EPS) * g[0] + be[0]

    xn = ln(x + attn, g1, be1)
    f = jnp.maximum(xn @ w1 + b1[0], 0.0) @ w2 + b2[0]
    return ln(f + xn, g2, be2)


def init_params(key):
    ks = jax.random.split(key, 10)
    scale = 0.05
    wq = jax.random.normal(ks[0], (D, D), jnp.float32) * scale
    wk = jax.random.normal(ks[1], (D, D), jnp.float32) * scale
    wv = jax.random.normal(ks[2], (D, D), jnp.float32) * scale
    wo = jax.random.normal(ks[3], (D, D), jnp.float32) * scale
    bo = jax.random.normal(ks[4], (1, D), jnp.float32) * scale
    w1 = jax.random.normal(ks[5], (D, MLP), jnp.float32) * scale
    b1 = jax.random.normal(ks[6], (1, MLP), jnp.float32) * scale
    w2 = jax.random.normal(ks[7], (MLP, D), jnp.float32) * scale
    b2 = jax.random.normal(ks[8], (1, D), jnp.float32) * scale
    # nn.LayerNorm default init: weight=1, bias=0
    g1 = jnp.ones((1, D), jnp.float32)
    be1 = jnp.zeros((1, D), jnp.float32)
    g2 = jnp.ones((1, D), jnp.float32)
    be2 = jnp.zeros((1, D), jnp.float32)
    return (wq, wk, wv, wo, bo, w1, b1, w2, b2, g1, be1, g2, be2)


if __name__ == "__main__":
    key = jax.random.PRNGKey(0)
    kx, kp = jax.random.split(key)
    x = jax.random.normal(kx, (B, S, D), jnp.float32)
    params = init_params(kp)
    prepped = prepare_params(params)          # one-time prep, hoisted out of the forward

    out = encoder_block(x, prepped)
    out = jax.block_until_ready(out)

    ref = encoder_block_ref(x, params)
    assert out.shape == (B, S, D)
    err = float(jnp.max(jnp.abs(out - ref)))
    # tolerance accounts for bf16 matmul operands (f32 accumulation) and the approximate
    # (EUP) reciprocal in the softmax denominator vs the pure-f32 reference
    assert err < 2.5e-2, f"max abs diff = {err}"
    print("KERNEL_OK")
</pallas_src>

<mosaic_0001>
module attributes {stable_mosaic.version = 11 : i64} {
  func.func @encoder_block_kernel(%arg0: i32, %arg1: memref<1x16x64xf32, #tpu.memory_space<vmem>>, %arg2: memref<64x64xbf16, #tpu.memory_space<vmem>>, %arg3: memref<128x64xbf16, #tpu.memory_space<vmem>>, %arg4: memref<64x64xbf16, #tpu.memory_space<vmem>>, %arg5: memref<64x128xbf16, #tpu.memory_space<vmem>>, %arg6: memref<128x64xbf16, #tpu.memory_space<vmem>>, %arg7: memref<1x128xf32, #tpu.memory_space<vmem>>, %arg8: memref<6x64xf32, #tpu.memory_space<vmem>>, %arg9: memref<1x16x64xf32, #tpu.memory_space<vmem>>) attributes {dimension_semantics = [#tpu.dimension_semantics<parallel>], iteration_bounds = array<i64: 2>, scalar_prefetch = 0 : i64, scratch_operands = 0 : i64, tpu.core_type = #tpu.core_type<tc>, window_params = [{transform_indices = @transform_0, window_bounds = array<i64: 1, 16, 64>}, {pipeline_mode = #tpu.pipeline_mode<synchronous>, transform_indices = @transform_1, window_bounds = array<i64: 64, 64>}, {pipeline_mode = #tpu.pipeline_mode<synchronous>, transform_indices = @transform_2, window_bounds = array<i64: 128, 64>}, {pipeline_mode = #tpu.pipeline_mode<synchronous>, transform_indices = @transform_3, window_bounds = array<i64: 64, 64>}, {pipeline_mode = #tpu.pipeline_mode<synchronous>, transform_indices = @transform_4, window_bounds = array<i64: 64, 128>}, {pipeline_mode = #tpu.pipeline_mode<synchronous>, transform_indices = @transform_5, window_bounds = array<i64: 128, 64>}, {pipeline_mode = #tpu.pipeline_mode<synchronous>, transform_indices = @transform_6, window_bounds = array<i64: 1, 128>}, {pipeline_mode = #tpu.pipeline_mode<synchronous>, transform_indices = @transform_7, window_bounds = array<i64: 6, 64>}, {transform_indices = @transform_8, window_bounds = array<i64: 1, 16, 64>}]} {
    %c0 = arith.constant 0 : index
    %c0_0 = arith.constant 0 : index
    %c0_1 = arith.constant 0 : index
    %0 = vector.load %arg1[%c0, %c0_0, %c0_1] : memref<1x16x64xf32, #tpu.memory_space<vmem>>, vector<1x16x64xf32>
    %1 = vector.shape_cast %0 : vector<1x16x64xf32> to vector<16x64xf32>
    %2 = arith.truncf %1 : vector<16x64xf32> to vector<16x64xbf16>
    %c0_2 = arith.constant 0 : index
    %c0_3 = arith.constant 0 : index
    %3 = vector.load %arg2[%c0_2, %c0_3] : memref<64x64xbf16, #tpu.memory_space<vmem>>, vector<64x64xbf16>
    %cst = arith.constant dense<0.000000e+00> : vector<16x64xf32>
    %4 = tpu.matmul %2, %3, %cst {dimension_numbers = #tpu.dot_dimension_numbers<[1], [0], [0], [1], [0, 0, 1, 1], [], []>} : vector<16x64xbf16>, vector<64x64xbf16>, vector<16x64xf32> -> vector<16x64xf32>
    %c0_4 = arith.constant 0 : index
    %c0_5 = arith.constant 0 : index
    %5 = vector.load %arg3[%c0_4, %c0_5] : memref<128x64xbf16, #tpu.memory_space<vmem>>, vector<128x64xbf16>
    %cst_6 = arith.constant dense<0.000000e+00> : vector<128x16xf32>
    %6 = tpu.matmul %5, %2, %cst_6 {dimension_numbers = #tpu.dot_dimension_numbers<[1], [1], [0], [0], [0, 0, 1, 0], [], []>} : vector<128x64xbf16>, vector<16x64xbf16>, vector<128x16xf32> -> vector<128x16xf32>
    %7 = vector.extract_strided_slice %4 {offsets = [0, 0], sizes = [16, 16], strides = [1, 1]} : vector<16x64xf32> to vector<16x16xf32>
    %8 = arith.truncf %7 : vector<16x16xf32> to vector<16x16xbf16>
    %9 = vector.extract_strided_slice %6 {offsets = [0, 0], sizes = [16, 16], strides = [1, 1]} : vector<128x16xf32> to vector<16x16xf32>
    %10 = arith.truncf %9 : vector<16x16xf32> to vector<16x16xbf16>
    %11 = vector.extract_strided_slice %6 {offsets = [64, 0], sizes = [16, 16], strides = [1, 1]} : vector<128x16xf32> to vector<16x16xf32>
    %cst_7 = arith.constant dense<0.000000e+00> : vector<16x16xf32>
    %12 = tpu.matmul %8, %10, %cst_7 {dimension_numbers = #tpu.dot_dimension_numbers<[1], [0], [0], [1], [0, 0, 1, 1], [], []>} : vector<16x16xbf16>, vector<16x16xbf16>, vector<16x16xf32> -> vector<16x16xf32>
    %cst_8 = arith.constant dense<0xFF800000> : vector<16xf32>
    %13 = vector.multi_reduction <maximumf>, %12, %cst_8 [1] : vector<16x16xf32> to vector<16xf32>
    %14 = vector.shape_cast %13 : vector<16xf32> to vector<16x1xf32>
    %15 = vector.broadcast %14 : vector<16x1xf32> to vector<16x16xf32>
    %16 = arith.subf %12, %15 : vector<16x16xf32>
    %17 = math.exp %16 : vector<16x16xf32>
    %cst_9 = arith.constant dense<0.000000e+00> : vector<16xf32>
    %18 = vector.multi_reduction <add>, %17, %cst_9 [1] : vector<16x16xf32> to vector<16xf32>
    %19 = vector.shape_cast %18 : vector<16xf32> to vector<16x1xf32>
    %20 = tpu.reciprocal %19 {approx = true} : vector<16x1xf32> -> vector<16x1xf32>
    %21 = vector.broadcast %20 : vector<16x1xf32> to vector<16x16xf32>
    %22 = arith.mulf %17, %21 : vector<16x16xf32>
    %23 = arith.truncf %22 : vector<16x16xf32> to vector<16x16xbf16>
    %24 = arith.truncf %11 : vector<16x16xf32> to vector<16x16xbf16>
    %cst_10 = arith.constant dense<0.000000e+00> : vector<16x16xf32>
    %25 = tpu.matmul %23, %24, %cst_10 {dimension_numbers = #tpu.dot_dimension_numbers<[1], [1], [0], [0], [0, 0, 1, 0], [], []>} : vector<16x16xbf16>, vector<16x16xbf16>, vector<16x16xf32> -> vector<16x16xf32>
    %26 = vector.extract_strided_slice %4 {offsets = [0, 16], sizes = [16, 16], strides = [1, 1]} : vector<16x64xf32> to vector<16x16xf32>
    %27 = arith.truncf %26 : vector<16x16xf32> to vector<16x16xbf16>
    %28 = vector.extract_strided_slice %6 {offsets = [16, 0], sizes = [16, 16], strides = [1, 1]} : vector<128x16xf32> to vector<16x16xf32>
    %29 = arith.truncf %28 : vector<16x16xf32> to vector<16x16xbf16>
    %30 = vector.extract_strided_slice %6 {offsets = [80, 0], sizes = [16, 16], strides = [1, 1]} : vector<128x16xf32> to vector<16x16xf32>
    %cst_11 = arith.constant dense<0.000000e+00> : vector<16x16xf32>
    %31 = tpu.matmul %27, %29, %cst_11 {dimension_numbers = #tpu.dot_dimension_numbers<[1], [0], [0], [1], [0, 0, 1, 1], [], []>} : vector<16x16xbf16>, vector<16x16xbf16>, vector<16x16xf32> -> vector<16x16xf32>
    %cst_12 = arith.constant dense<0xFF800000> : vector<16xf32>
    %32 = vector.multi_reduction <maximumf>, %31, %cst_12 [1] : vector<16x16xf32> to vector<16xf32>
    %33 = vector.shape_cast %32 : vector<16xf32> to vector<16x1xf32>
    %34 = vector.broadcast %33 : vector<16x1xf32> to vector<16x16xf32>
    %35 = arith.subf %31, %34 : vector<16x16xf32>
    %36 = math.exp %35 : vector<16x16xf32>
    %cst_13 = arith.constant dense<0.000000e+00> : vector<16xf32>
    %37 = vector.multi_reduction <add>, %36, %cst_13 [1] : vector<16x16xf32> to vector<16xf32>
    %38 = vector.shape_cast %37 : vector<16xf32> to vector<16x1xf32>
    %39 = tpu.reciprocal %38 {approx = true} : vector<16x1xf32> -> vector<16x1xf32>
    %40 = vector.broadcast %39 : vector<16x1xf32> to vector<16x16xf32>
    %41 = arith.mulf %36, %40 : vector<16x16xf32>
    %42 = arith.truncf %41 : vector<16x16xf32> to vector<16x16xbf16>
    %43 = arith.truncf %30 : vector<16x16xf32> to vector<16x16xbf16>
    %cst_14 = arith.constant dense<0.000000e+00> : vector<16x16xf32>
    %44 = tpu.matmul %42, %43, %cst_14 {dimension_numbers = #tpu.dot_dimension_numbers<[1], [1], [0], [0], [0, 0, 1, 0], [], []>} : vector<16x16xbf16>, vector<16x16xbf16>, vector<16x16xf32> -> vector<16x16xf32>
    %45 = vector.extract_strided_slice %4 {offsets = [0, 32], sizes = [16, 16], strides = [1, 1]} : vector<16x64xf32> to vector<16x16xf32>
    %46 = arith.truncf %45 : vector<16x16xf32> to vector<16x16xbf16>
    %47 = vector.extract_strided_slice %6 {offsets = [32, 0], sizes = [16, 16], strides = [1, 1]} : vector<128x16xf32> to vector<16x16xf32>
    %48 = arith.truncf %47 : vector<16x16xf32> to vector<16x16xbf16>
    %49 = vector.extract_strided_slice %6 {offsets = [96, 0], sizes = [16, 16], strides = [1, 1]} : vector<128x16xf32> to vector<16x16xf32>
    %cst_15 = arith.constant dense<0.000000e+00> : vector<16x16xf32>
    %50 = tpu.matmul %46, %48, %cst_15 {dimension_numbers = #tpu.dot_dimension_numbers<[1], [0], [0], [1], [0, 0, 1, 1], [], []>} : vector<16x16xbf16>, vector<16x16xbf16>, vector<16x16xf32> -> vector<16x16xf32>
    %cst_16 = arith.constant dense<0xFF800000> : vector<16xf32>
    %51 = vector.multi_reduction <maximumf>, %50, %cst_16 [1] : vector<16x16xf32> to vector<16xf32>
    %52 = vector.shape_cast %51 : vector<16xf32> to vector<16x1xf32>
    %53 = vector.broadcast %52 : vector<16x1xf32> to vector<16x16xf32>
    %54 = arith.subf %50, %53 : vector<16x16xf32>
    %55 = math.exp %54 : vector<16x16xf32>
    %cst_17 = arith.constant dense<0.000000e+00> : vector<16xf32>
    %56 = vector.multi_reduction <add>, %55, %cst_17 [1] : vector<16x16xf32> to vector<16xf32>
    %57 = vector.shape_cast %56 : vector<16xf32> to vector<16x1xf32>
    %58 = tpu.reciprocal %57 {approx = true} : vector<16x1xf32> -> vector<16x1xf32>
    %59 = vector.broadcast %58 : vector<16x1xf32> to vector<16x16xf32>
    %60 = arith.mulf %55, %59 : vector<16x16xf32>
    %61 = arith.truncf %60 : vector<16x16xf32> to vector<16x16xbf16>
    %62 = arith.truncf %49 : vector<16x16xf32> to vector<16x16xbf16>
    %cst_18 = arith.constant dense<0.000000e+00> : vector<16x16xf32>
    %63 = tpu.matmul %61, %62, %cst_18 {dimension_numbers = #tpu.dot_dimension_numbers<[1], [1], [0], [0], [0, 0, 1, 0], [], []>} : vector<16x16xbf16>, vector<16x16xbf16>, vector<16x16xf32> -> vector<16x16xf32>
    %64 = vector.extract_strided_slice %4 {offsets = [0, 48], sizes = [16, 16], strides = [1, 1]} : vector<16x64xf32> to vector<16x16xf32>
    %65 = arith.truncf %64 : vector<16x16xf32> to vector<16x16xbf16>
    %66 = vector.extract_strided_slice %6 {offsets = [48, 0], sizes = [16, 16], strides = [1, 1]} : vector<128x16xf32> to vector<16x16xf32>
    %67 = arith.truncf %66 : vector<16x16xf32> to vector<16x16xbf16>
    %68 = vector.extract_strided_slice %6 {offsets = [112, 0], sizes = [16, 16], strides = [1, 1]} : vector<128x16xf32> to vector<16x16xf32>
    %cst_19 = arith.constant dense<0.000000e+00> : vector<16x16xf32>
    %69 = tpu.matmul %65, %67, %cst_19 {dimension_numbers = #tpu.dot_dimension_numbers<[1], [0], [0], [1], [0, 0, 1, 1], [], []>} : vector<16x16xbf16>, vector<16x16xbf16>, vector<16x16xf32> -> vector<16x16xf32>
    %cst_20 = arith.constant dense<0xFF800000> : vector<16xf32>
    %70 = vector.multi_reduction <maximumf>, %69, %cst_20 [1] : vector<16x16xf32> to vector<16xf32>
    %71 = vector.shape_cast %70 : vector<16xf32> to vector<16x1xf32>
    %72 = vector.broadcast %71 : vector<16x1xf32> to vector<16x16xf32>
    %73 = arith.subf %69, %72 : vector<16x16xf32>
    %74 = math.exp %73 : vector<16x16xf32>
    %cst_21 = arith.constant dense<0.000000e+00> : vector<16xf32>
    %75 = vector.multi_reduction <add>, %74, %cst_21 [1] : vector<16x16xf32> to vector<16xf32>
    %76 = vector.shape_cast %75 : vector<16xf32> to vector<16x1xf32>
    %77 = tpu.reciprocal %76 {approx = true} : vector<16x1xf32> -> vector<16x1xf32>
    %78 = vector.broadcast %77 : vector<16x1xf32> to vector<16x16xf32>
    %79 = arith.mulf %74, %78 : vector<16x16xf32>
    %80 = arith.truncf %79 : vector<16x16xf32> to vector<16x16xbf16>
    %81 = arith.truncf %68 : vector<16x16xf32> to vector<16x16xbf16>
    %cst_22 = arith.constant dense<0.000000e+00> : vector<16x16xf32>
    %82 = tpu.matmul %80, %81, %cst_22 {dimension_numbers = #tpu.dot_dimension_numbers<[1], [1], [0], [0], [0, 0, 1, 0], [], []>} : vector<16x16xbf16>, vector<16x16xbf16>, vector<16x16xf32> -> vector<16x16xf32>
    %83 = tpu.concatenate %25, %44, %63, %82 in 1 : vector<16x16xf32>, vector<16x16xf32>, vector<16x16xf32>, vector<16x16xf32> -> vector<16x64xf32>
    %c0_23 = arith.constant 0 : index
    %c0_24 = arith.constant 0 : index
    %84 = vector.load %arg8[%c0_23, %c0_24] : memref<6x64xf32, #tpu.memory_space<vmem>>, vector<1x64xf32>
    %85 = arith.truncf %83 : vector<16x64xf32> to vector<16x64xbf16>
    %c0_25 = arith.constant 0 : index
    %c0_26 = arith.constant 0 : index
    %86 = vector.load %arg4[%c0_25, %c0_26] : memref<64x64xbf16, #tpu.memory_space<vmem>>, vector<64x64xbf16>
    %cst_27 = arith.constant dense<0.000000e+00> : vector<16x64xf32>
    %87 = tpu.matmul %85, %86, %cst_27 {dimension_numbers = #tpu.dot_dimension_numbers<[1], [0], [0], [1], [0, 0, 1, 1], [], []>} : vector<16x64xbf16>, vector<64x64xbf16>, vector<16x64xf32> -> vector<16x64xf32>
    %88 = vector.broadcast %84 : vector<1x64xf32> to vector<16x64xf32>
    %89 = arith.addf %87, %88 : vector<16x64xf32>
    %c1 = arith.constant 1 : index
    %c0_28 = arith.constant 0 : index
    %90 = vector.load %arg8[%c1, %c0_28] : memref<6x64xf32, #tpu.memory_space<vmem>>, vector<1x64xf32>
    %c2 = arith.constant 2 : index
    %c0_29 = arith.constant 0 : index
    %91 = vector.load %arg8[%c2, %c0_29] : memref<6x64xf32, #tpu.memory_space<vmem>>, vector<1x64xf32>
    %92 = arith.addf %1, %89 : vector<16x64xf32>
    %cst_30 = arith.constant dense<0.000000e+00> : vector<16xf32>
    %93 = vector.multi_reduction <add>, %92, %cst_30 [1] : vector<16x64xf32> to vector<16xf32>
    %94 = vector.shape_cast %93 : vector<16xf32> to vector<16x1xf32>
    %cst_31 = arith.constant 6.400000e+01 : f32
    %95 = vector.broadcast %cst_31 : f32 to vector<16x1xf32>
    %96 = arith.divf %94, %95 : vector<16x1xf32>
    %97 = vector.broadcast %96 : vector<16x1xf32> to vector<16x64xf32>
    %98 = arith.subf %92, %97 : vector<16x64xf32>
    %99 = arith.mulf %98, %98 : vector<16x64xf32>
    %cst_32 = arith.constant dense<0.000000e+00> : vector<16xf32>
    %100 = vector.multi_reduction <add>, %99, %cst_32 [1] : vector<16x64xf32> to vector<16xf32>
    %101 = vector.shape_cast %100 : vector<16xf32> to vector<16x1xf32>
    %cst_33 = arith.constant 6.400000e+01 : f32
    %102 = vector.broadcast %cst_33 : f32 to vector<16x1xf32>
    %103 = arith.divf %101, %102 : vector<16x1xf32>
    %104 = vector.broadcast %96 : vector<16x1xf32> to vector<16x64xf32>
    %105 = arith.subf %92, %104 : vector<16x64xf32>
    %cst_34 = arith.constant 9.99999974E-6 : f32
    %106 = vector.broadcast %cst_34 : f32 to vector<16x1xf32>
    %107 = arith.addf %103, %106 : vector<16x1xf32>
    %108 = math.rsqrt %107 : vector<16x1xf32>
    %109 = vector.broadcast %108 : vector<16x1xf32> to vector<16x64xf32>
    %110 = arith.mulf %105, %109 : vector<16x64xf32>
    %111 = vector.broadcast %90 : vector<1x64xf32> to vector<16x64xf32>
    %112 = arith.mulf %110, %111 : vector<16x64xf32>
    %113 = vector.broadcast %91 : vector<1x64xf32> to vector<16x64xf32>
    %114 = arith.addf %112, %113 : vector<16x64xf32>
    %115 = arith.truncf %114 : vector<16x64xf32> to vector<16x64xbf16>
    %c0_35 = arith.constant 0 : index
    %c0_36 = arith.constant 0 : index
    %116 = vector.load %arg5[%c0_35, %c0_36] : memref<64x128xbf16, #tpu.memory_space<vmem>>, vector<64x128xbf16>
    %cst_37 = arith.constant dense<0.000000e+00> : vector<16x128xf32>
    %117 = tpu.matmul %115, %116, %cst_37 {dimension_numbers = #tpu.dot_dimension_numbers<[1], [0], [0], [1], [0, 0, 1, 1], [], []>} : vector<16x64xbf16>, vector<64x128xbf16>, vector<16x128xf32> -> vector<16x128xf32>
    %c0_38 = arith.constant 0 : index
    %c0_39 = arith.constant 0 : index
    %118 = vector.load %arg7[%c0_38, %c0_39] : memref<1x128xf32, #tpu.memory_space<vmem>>, vector<1x128xf32>
    %119 = vector.broadcast %118 : vector<1x128xf32> to vector<16x128xf32>
    %120 = arith.addf %117, %119 : vector<16x128xf32>
    %cst_40 = arith.constant 0.000000e+00 : f32
    %121 = vector.broadcast %cst_40 : f32 to vector<16x128xf32>
    %122 = arith.maximumf %120, %121 : vector<16x128xf32>
    %123 = arith.truncf %122 : vector<16x128xf32> to vector<16x128xbf16>
    %c0_41 = arith.constant 0 : index
    %c0_42 = arith.constant 0 : index
    %124 = vector.load %arg6[%c0_41, %c0_42] : memref<128x64xbf16, #tpu.memory_space<vmem>>, vector<128x64xbf16>
    %cst_43 = arith.constant dense<0.000000e+00> : vector<16x64xf32>
    %125 = tpu.matmul %123, %124, %cst_43 {dimension_numbers = #tpu.dot_dimension_numbers<[1], [0], [0], [1], [0, 0, 1, 1], [], []>} : vector<16x128xbf16>, vector<128x64xbf16>, vector<16x64xf32> -> vector<16x64xf32>
    %c3 = arith.constant 3 : index
    %c0_44 = arith.constant 0 : index
    %126 = vector.load %arg8[%c3, %c0_44] : memref<6x64xf32, #tpu.memory_space<vmem>>, vector<1x64xf32>
    %127 = vector.broadcast %126 : vector<1x64xf32> to vector<16x64xf32>
    %128 = arith.addf %125, %127 : vector<16x64xf32>
    %c4 = arith.constant 4 : index
    %c0_45 = arith.constant 0 : index
    %129 = vector.load %arg8[%c4, %c0_45] : memref<6x64xf32, #tpu.memory_space<vmem>>, vector<1x64xf32>
    %c5 = arith.constant 5 : index
    %c0_46 = arith.constant 0 : index
    %130 = vector.load %arg8[%c5, %c0_46] : memref<6x64xf32, #tpu.memory_space<vmem>>, vector<1x64xf32>
    %131 = arith.addf %128, %114 : vector<16x64xf32>
    %cst_47 = arith.constant dense<0.000000e+00> : vector<16xf32>
    %132 = vector.multi_reduction <add>, %131, %cst_47 [1] : vector<16x64xf32> to vector<16xf32>
    %133 = vector.shape_cast %132 : vector<16xf32> to vector<16x1xf32>
    %cst_48 = arith.constant 6.400000e+01 : f32
    %134 = vector.broadcast %cst_48 : f32 to vector<16x1xf32>
    %135 = arith.divf %133, %134 : vector<16x1xf32>
    %136 = vector.broadcast %135 : vector<16x1xf32> to vector<16x64xf32>
    %137 = arith.subf %131, %136 : vector<16x64xf32>
    %138 = arith.mulf %137, %137 : vector<16x64xf32>
    %cst_49 = arith.constant dense<0.000000e+00> : vector<16xf32>
    %139 = vector.multi_reduction <add>, %138, %cst_49 [1] : vector<16x64xf32> to vector<16xf32>
    %140 = vector.shape_cast %139 : vector<16xf32> to vector<16x1xf32>
    %cst_50 = arith.constant 6.400000e+01 : f32
    %141 = vector.broadcast %cst_50 : f32 to vector<16x1xf32>
    %142 = arith.divf %140, %141 : vector<16x1xf32>
    %143 = vector.broadcast %135 : vector<16x1xf32> to vector<16x64xf32>
    %144 = arith.subf %131, %143 : vector<16x64xf32>
    %cst_51 = arith.constant 9.99999974E-6 : f32
    %145 = vector.broadcast %cst_51 : f32 to vector<16x1xf32>
    %146 = arith.addf %142, %145 : vector<16x1xf32>
    %147 = math.rsqrt %146 : vector<16x1xf32>
    %148 = vector.broadcast %147 : vector<16x1xf32> to vector<16x64xf32>
    %149 = arith.mulf %144, %148 : vector<16x64xf32>
    %150 = vector.broadcast %129 : vector<1x64xf32> to vector<16x64xf32>
    %151 = arith.mulf %149, %150 : vector<16x64xf32>
    %152 = vector.broadcast %130 : vector<1x64xf32> to vector<16x64xf32>
    %153 = arith.addf %151, %152 : vector<16x64xf32>
    %c0_52 = arith.constant 0 : index
    %c0_53 = arith.constant 0 : index
    %c0_54 = arith.constant 0 : index
    %154 = vector.load %arg9[%c0_52, %c0_53, %c0_54] : memref<1x16x64xf32, #tpu.memory_space<vmem>>, vector<1x16x64xf32>
    %155 = vector.shape_cast %154 : vector<1x16x64xf32> to vector<16x64xf32>
    %156 = vector.shape_cast %153 : vector<16x64xf32> to vector<1x16x64xf32>
    tpu.vector_store %arg9[%c0_52, %c0_53, %c0_54], %156 {strides = array<i32>} : memref<1x16x64xf32, #tpu.memory_space<vmem>>, vector<1x16x64xf32>,
    return
  }
  func.func @transform_0(%arg0: i32) -> (i32, i32, i32) {
    %c0_i32 = arith.constant 0 : i32
    %c0_i32_0 = arith.constant 0 : i32
    %c0_i32_1 = arith.constant 0 : i32
    return %arg0, %c0_i32, %c0_i32_0 : i32, i32, i32
  }
  func.func @transform_1(%arg0: i32) -> (i32, i32) {
    %c0_i32 = arith.constant 0 : i32
    %c0_i32_0 = arith.constant 0 : i32
    %c0_i32_1 = arith.constant 0 : i32
    return %c0_i32, %c0_i32_0 : i32, i32
  }
  func.func @transform_2(%arg0: i32) -> (i32, i32) {
    %c0_i32 = arith.constant 0 : i32
    %c0_i32_0 = arith.constant 0 : i32
    %c0_i32_1 = arith.constant 0 : i32
    return %c0_i32, %c0_i32_0 : i32, i32
  }
  func.func @transform_3(%arg0: i32) -> (i32, i32) {
    %c0_i32 = arith.constant 0 : i32
    %c0_i32_0 = arith.constant 0 : i32
    %c0_i32_1 = arith.constant 0 : i32
    return %c0_i32, %c0_i32_0 : i32, i32
  }
  func.func @transform_4(%arg0: i32) -> (i32, i32) {
    %c0_i32 = arith.constant 0 : i32
    %c0_i32_0 = arith.constant 0 : i32
    %c0_i32_1 = arith.constant 0 : i32
    return %c0_i32, %c0_i32_0 : i32, i32
  }
  func.func @transform_5(%arg0: i32) -> (i32, i32) {
    %c0_i32 = arith.constant 0 : i32
    %c0_i32_0 = arith.constant 0 : i32
    %c0_i32_1 = arith.constant 0 : i32
    return %c0_i32, %c0_i32_0 : i32, i32
  }
  func.func @transform_6(%arg0: i32) -> (i32, i32) {
    %c0_i32 = arith.constant 0 : i32
    %c0_i32_0 = arith.constant 0 : i32
    %c0_i32_1 = arith.constant 0 : i32
    return %c0_i32, %c0_i32_0 : i32, i32
  }
  func.func @transform_7(%arg0: i32) -> (i32, i32) {
    %c0_i32 = arith.constant 0 : i32
    %c0_i32_0 = arith.constant 0 : i32
    %c0_i32_1 = arith.constant 0 : i32
    return %c0_i32, %c0_i32_0 : i32, i32
  }
  func.func @transform_8(%arg0: i32) -> (i32, i32, i32) {
    %c0_i32 = arith.constant 0 : i32
    %c0_i32_0 = arith.constant 0 : i32
    %c0_i32_1 = arith.constant 0 : i32
    return %arg0, %c0_i32, %c0_i32_0 : i32, i32, i32
  }
}

</mosaic_0001>

<llo_original>
// kernel: tpu_custom_call.1
$region0: #{tpu_custom_call.1}
  #allocation0 [shape = 'u32[]', space=smem, size = 0x4, offset = 0x4, fixed_abs, tag = 'smem constant byte address 0x4 - core index']
  #allocation1 [shape = 'u32[144,128]{1,0:T(1,128)}', space=vmem, size = 0x12000, scoped, tag = 'internal scratch']
  %s0 = inlined_call_operand.vmem [shape: f32[2,16,64], index: 0, kind: input, shape index: {}]
  %s1 = inlined_call_operand.vmem [shape: bf16[64,64], index: 1, kind: input, shape index: {}]
  %s2 = inlined_call_operand.vmem [shape: bf16[128,64], index: 2, kind: input, shape index: {}]
  %s3 = inlined_call_operand.vmem [shape: bf16[64,64], index: 3, kind: input, shape index: {}]
  %s4 = inlined_call_operand.vmem [shape: bf16[64,128], index: 4, kind: input, shape index: {}]
  %s5 = inlined_call_operand.vmem [shape: bf16[128,64], index: 5, kind: input, shape index: {}]
  %s6 = inlined_call_operand.vmem [shape: f32[1,128], index: 6, kind: input, shape index: {}]
  %s7 = inlined_call_operand.vmem [shape: f32[6,64], index: 7, kind: input, shape index: {}]
  %s8 = inlined_call_operand.hbm [shape: f32[2,16,64], index: 8, kind: output, shape index: {}]
  %s9 = sld [smem:[#allocation0]]
  $region65: #{tpu_custom_call.1} parent=0
    _
  %s11 = ssub.s32 1, %s9
  %s12 = scalar_select 0, %s11, %s9
  $region1: #{tpu_custom_call.1} parent=0
    #allocation2 [shape = 'u8[16384]{0}', space=vmem, size = 0x4000, scoped, tag = 'output window, operand 0']
    #allocation3 [shape = 's32[2]{0}', space=sflag, size = 0x8, scoped, tag = 'scoped memory for tpu_custom_call.1']
    %13 = vsyncpa [#allocation3], 0
    %s14 = scalar_lea.sflag [#allocation3], 1
    %15 = vsyncpa %s14, 0
    loop: start=0, step=1, limit=4
    $region2: #{tpu_custom_call.1} parent=1 // loop_pre_header
      _
    $region3: #{tpu_custom_call.1} parent=1 // loop_header
      %s17 = sphi 0, %s21
      %p18 = scmp.ge.s32.totalorder %s17, 4
      %s27 = sphi 0, %s29
      %s30 = sphi 0, %s27
      %s31 = sphi 0, %s30
      %s47 = sphi 0, %s31
      %s51 = sphi 0, %s51
      %s53 = sphi 0, %s51
      %s54 = sphi 0, %s53
      %s68 = sphi 0, %s54
      %s72 = sphi 0, %s72
      %s74 = sphi 0, %s72
      %s75 = sphi 0, %s74
      %s89 = sphi 0, %s75
      %s93 = sphi 0, %s93
      %s95 = sphi 0, %s93
      %s96 = sphi 0, %s95
      %s110 = sphi 0, %s96
      %s114 = sphi 0, %s114
      %s116 = sphi 0, %s114
      %s117 = sphi 0, %s116
      %s131 = sphi 0, %s117
      %s135 = sphi 0, %s135
      %s137 = sphi 0, %s135
      %s138 = sphi 0, %s137
      %s152 = sphi 0, %s138
      %s156 = sphi 0, %s156
      %s158 = sphi 0, %s156
      %s159 = sphi 0, %s158
      %s173 = sphi 0, %s159
      %s177 = sphi 0, %s177
      %s179 = sphi 0, %s177
      %s180 = sphi 0, %s179
      %s194 = sphi 0, %s180
      %s200 = sphi 0, %s202
      %s203 = sphi 0, %s200
      %s204 = sphi 0, %s203
      %s220 = sphi 0, %s204
    $region4: #{tpu_custom_call.1} parent=1 // loop_header_branch
      %20 = sbr.rel (%p18) target = $region8
    $region5: #{tpu_custom_call.1} parent=1 // loop_body
      %s22 = ssub.s32 %s17, 1
      %s23 = ssub.s32 %s17, 2
      %s24 = sadd.s32 %s17, 1
      %s25 = ssub.s32 %s17, %s24
      %p26 = scmp.eq.s32.totalorder %s25, 0
      %s28 = sadd.s32 %s27, 1
      %s29 = scalar_select %p26, %s27, %s28
      %p32 = pneg %p26
      %p33 = scmp.eq.s32.totalorder %s17, 1
      %p34 = por %p32, %p33
      %p35 = scmp.ne.s32.totalorder %s27, %s30
      %p36 = scmp.eq.s32.totalorder %s17, 0
      %p37 = por %p35, %p36
      %p38 = scmp.ne.s32.totalorder %s27, %s30
      %p39 = scmp.eq.s32.totalorder %s22, 1
      %p40 = por %p38, %p39
      %p41 = scmp.ne.s32.totalorder %s30, %s31
      %p42 = scmp.eq.s32.totalorder %s22, 0
      %p43 = por %p41, %p42
      %p44 = scmp.ne.s32.totalorder %s30, %s31
      %p45 = scmp.eq.s32.totalorder %s23, 1
      %p46 = por %p44, %p45
      %p48 = scmp.ne.s32.totalorder %s31, %s47
      %p49 = scmp.eq.s32.totalorder %s23, 0
      %p50 = por %p48, %p49
      %s52 = sadd.s32 %s51, 1
      %p55 = scmp.eq.s32.totalorder %s17, 1
      %p56 = scmp.ne.s32.totalorder %s51, %s53
      %p57 = scmp.eq.s32.totalorder %s17, 0
      %p58 = por %p56, %p57
      %p59 = scmp.ne.s32.totalorder %s51, %s53
      %p60 = scmp.eq.s32.totalorder %s22, 1
      %p61 = por %p59, %p60
      %p62 = scmp.ne.s32.totalorder %s53, %s54
      %p63 = scmp.eq.s32.totalorder %s22, 0
      %p64 = por %p62, %p63
      %p65 = scmp.ne.s32.totalorder %s53, %s54
      %p66 = scmp.eq.s32.totalorder %s23, 1
      %p67 = por %p65, %p66
      %p69 = scmp.ne.s32.totalorder %s54, %s68
      %p70 = scmp.eq.s32.totalorder %s23, 0
      %p71 = por %p69, %p70
      %s73 = sadd.s32 %s72, 1
      %p76 = scmp.eq.s32.totalorder %s17, 1
      %p77 = scmp.ne.s32.totalorder %s72, %s74
      %p78 = scmp.eq.s32.totalorder %s17, 0
      %p79 = por %p77, %p78
      %p80 = scmp.ne.s32.totalorder %s72, %s74
      %p81 = scmp.eq.s32.totalorder %s22, 1
      %p82 = por %p80, %p81
      %p83 = scmp.ne.s32.totalorder %s74, %s75
      %p84 = scmp.eq.s32.totalorder %s22, 0
      %p85 = por %p83, %p84
      %p86 = scmp.ne.s32.totalorder %s74, %s75
      %p87 = scmp.eq.s32.totalorder %s23, 1
      %p88 = por %p86, %p87
      %p90 = scmp.ne.s32.totalorder %s75, %s89
      %p91 = scmp.eq.s32.totalorder %s23, 0
      %p92 = por %p90, %p91
      %s94 = sadd.s32 %s93, 1
      %p97 = scmp.eq.s32.totalorder %s17, 1
      %p98 = scmp.ne.s32.totalorder %s93, %s95
      %p99 = scmp.eq.s32.totalorder %s17, 0
      %p100 = por %p98, %p99
      %p101 = scmp.ne.s32.totalorder %s93, %s95
      %p102 = scmp.eq.s32.totalorder %s22, 1
      %p103 = por %p101, %p102
      %p104 = scmp.ne.s32.totalorder %s95, %s96
      %p105 = scmp.eq.s32.totalorder %s22, 0
      %p106 = por %p104, %p105
      %p107 = scmp.ne.s32.totalorder %s95, %s96
      %p108 = scmp.eq.s32.totalorder %s23, 1
      %p109 = por %p107, %p108
      %p111 = scmp.ne.s32.totalorder %s96, %s110
      %p112 = scmp.eq.s32.totalorder %s23, 0
      %p113 = por %p111, %p112
      %s115 = sadd.s32 %s114, 1
      %p118 = scmp.eq.s32.totalorder %s17, 1
      %p119 = scmp.ne.s32.totalorder %s114, %s116
      %p120 = scmp.eq.s32.totalorder %s17, 0
      %p121 = por %p119, %p120
      %p122 = scmp.ne.s32.totalorder %s114, %s116
      %p123 = scmp.eq.s32.totalorder %s22, 1
      %p124 = por %p122, %p123
      %p125 = scmp.ne.s32.totalorder %s116, %s117
      %p126 = scmp.eq.s32.totalorder %s22, 0
      %p127 = por %p125, %p126
      %p128 = scmp.ne.s32.totalorder %s116, %s117
      %p129 = scmp.eq.s32.totalorder %s23, 1
      %p130 = por %p128, %p129
      %p132 = scmp.ne.s32.totalorder %s117, %s131
      %p133 = scmp.eq.s32.totalorder %s23, 0
      %p134 = por %p132, %p133
      %s136 = sadd.s32 %s135, 1
      %p139 = scmp.eq.s32.totalorder %s17, 1
      %p140 = scmp.ne.s32.totalorder %s135, %s137
      %p141 = scmp.eq.s32.totalorder %s17, 0
      %p142 = por %p140, %p141
      %p143 = scmp.ne.s32.totalorder %s135, %s137
      %p144 = scmp.eq.s32.totalorder %s22, 1
      %p145 = por %p143, %p144
      %p146 = scmp.ne.s32.totalorder %s137, %s138
      %p147 = scmp.eq.s32.totalorder %s22, 0
      %p148 = por %p146, %p147
      %p149 = scmp.ne.s32.totalorder %s137, %s138
      %p150 = scmp.eq.s32.totalorder %s23, 1
      %p151 = por %p149, %p150
      %p153 = scmp.ne.s32.totalorder %s138, %s152
      %p154 = scmp.eq.s32.totalorder %s23, 0
      %p155 = por %p153, %p154
      %s157 = sadd.s32 %s156, 1
      %p160 = scmp.eq.s32.totalorder %s17, 1
      %p161 = scmp.ne.s32.totalorder %s156, %s158
      %p162 = scmp.eq.s32.totalorder %s17, 0
      %p163 = por %p161, %p162
      %p164 = scmp.ne.s32.totalorder %s156, %s158
      %p165 = scmp.eq.s32.totalorder %s22, 1
      %p166 = por %p164, %p165
      %p167 = scmp.ne.s32.totalorder %s158, %s159
      %p168 = scmp.eq.s32.totalorder %s22, 0
      %p169 = por %p167, %p168
      %p170 = scmp.ne.s32.totalorder %s158, %s159
      %p171 = scmp.eq.s32.totalorder %s23, 1
      %p172 = por %p170, %p171
      %p174 = scmp.ne.s32.totalorder %s159, %s173
      %p175 = scmp.eq.s32.totalorder %s23, 0
      %p176 = por %p174, %p175
      %s178 = sadd.s32 %s177, 1
      %p181 = scmp.eq.s32.totalorder %s17, 1
      %p182 = scmp.ne.s32.totalorder %s177, %s179
      %p183 = scmp.eq.s32.totalorder %s17, 0
      %p184 = por %p182, %p183
      %p185 = scmp.ne.s32.totalorder %s177, %s179
      %p186 = scmp.eq.s32.totalorder %s22, 1
      %p187 = por %p185, %p186
      %p188 = scmp.ne.s32.totalorder %s179, %s180
      %p189 = scmp.eq.s32.totalorder %s22, 0
      %p190 = por %p188, %p189
      %p191 = scmp.ne.s32.totalorder %s179, %s180
      %p192 = scmp.eq.s32.totalorder %s23, 1
      %p193 = por %p191, %p192
      %p195 = scmp.ne.s32.totalorder %s180, %s194
      %p196 = scmp.eq.s32.totalorder %s23, 0
      %p197 = por %p195, %p196
      %s198 = ssub.s32 %s17, %s24
      %p199 = scmp.eq.s32.totalorder %s198, 0
      %s201 = sadd.s32 %s200, 1
      %s202 = scalar_select %p199, %s200, %s201
      %p205 = pneg %p199
      %p206 = scmp.eq.s32.totalorder %s17, 1
      %p207 = por %p205, %p206
      %p208 = scmp.ne.s32.totalorder %s200, %s203
      %p209 = scmp.eq.s32.totalorder %s17, 0
      %p210 = por %p208, %p209
      %p211 = scmp.ne.s32.totalorder %s200, %s203
      %p212 = scmp.eq.s32.totalorder %s22, 1
      %p213 = por %p211, %p212
      %p214 = scmp.ne.s32.totalorder %s203, %s204
      %p215 = scmp.eq.s32.totalorder %s22, 0
      %p216 = por %p214, %p215
      %p217 = scmp.ne.s32.totalorder %s203, %s204
      %p218 = scmp.eq.s32.totalorder %s23, 1
      %p219 = por %p217, %p218
      %p221 = scmp.ne.s32.totalorder %s204, %s220
      %p222 = scmp.eq.s32.totalorder %s23, 0
      %p223 = por %p221, %p222
      %p224 = scmp.le.s32.totalorder 1, %s17
      %p225 = scmp.lt.s32.totalorder %s17, 3
      %p226 = pnand %p224, %p225
      %p227 = pneg %p226
      // Predicated region
      $region9: #{tpu_custom_call.1} parent=5 // pred_check
        _
      $region10: #{tpu_custom_call.1} parent=5 // pred_check_branch
        %229 = sbr.rel (%p226) target = $region12
      $region11: #{tpu_custom_call.1} parent=5 // pred_region
        %s230 = ssub.s32 %s17, 1
        // Predicated region
        $region13: #{tpu_custom_call.1} parent=11 // pred_check
          %p231 = pneg %p64
        $region14: #{tpu_custom_call.1} parent=11 // pred_check_branch
          %233 = sbr.rel (%p231) target = $region16
        $region15: #{tpu_custom_call.1} parent=11 // pred_region
          _
        $region16: #{tpu_custom_call.1} parent=11 // pred_fallthru
          _
        // Predicated region
        $region17: #{tpu_custom_call.1} parent=11 // pred_check
          %p234 = pneg %p85
        $region18: #{tpu_custom_call.1} parent=11 // pred_check_branch
          %236 = sbr.rel (%p234) target = $region20
        $region19: #{tpu_custom_call.1} parent=11 // pred_region
          _
        $region20: #{tpu_custom_call.1} parent=11 // pred_fallthru
          _
        // Predicated region
        $region21: #{tpu_custom_call.1} parent=11 // pred_check
          %p237 = pneg %p106
        $region22: #{tpu_custom_call.1} parent=11 // pred_check_branch
          %239 = sbr.rel (%p237) target = $region24
        $region23: #{tpu_custom_call.1} parent=11 // pred_region
          _
        $region24: #{tpu_custom_call.1} parent=11 // pred_fallthru
          _
        // Predicated region
        $region25: #{tpu_custom_call.1} parent=11 // pred_check
          %p240 = pneg %p127
        $region26: #{tpu_custom_call.1} parent=11 // pred_check_branch
          %242 = sbr.rel (%p240) target = $region28
        $region27: #{tpu_custom_call.1} parent=11 // pred_region
          _
        $region28: #{tpu_custom_call.1} parent=11 // pred_fallthru
          _
        // Predicated region
        $region29: #{tpu_custom_call.1} parent=11 // pred_check
          %p243 = pneg %p148
        $region30: #{tpu_custom_call.1} parent=11 // pred_check_branch
          %245 = sbr.rel (%p243) target = $region32
        $region31: #{tpu_custom_call.1} parent=11 // pred_region
          _
        $region32: #{tpu_custom_call.1} parent=11 // pred_fallthru
          _
        // Predicated region
        $region33: #{tpu_custom_call.1} parent=11 // pred_check
          %p246 = pneg %p169
        $region34: #{tpu_custom_call.1} parent=11 // pred_check_branch
          %248 = sbr.rel (%p246) target = $region36
        $region35: #{tpu_custom_call.1} parent=11 // pred_region
          _
        $region36: #{tpu_custom_call.1} parent=11 // pred_fallthru
          _
        // Predicated region
        $region37: #{tpu_custom_call.1} parent=11 // pred_check
          %p249 = pneg %p190
        $region38: #{tpu_custom_call.1} parent=11 // pred_check_branch
          %251 = sbr.rel (%p249) target = $region40
        $region39: #{tpu_custom_call.1} parent=11 // pred_region
          _
        $region40: #{tpu_custom_call.1} parent=11 // pred_fallthru
          _
      $region12: #{tpu_custom_call.1} parent=5 // pred_fallthru
        _
      %p252 = scmp.lt.s32.totalorder %s17, 2
      // Predicated region
      $region41: #{tpu_custom_call.1} parent=5 // pred_check
        %p253 = pneg %p252
      $region42: #{tpu_custom_call.1} parent=5 // pred_check_branch
        %255 = sbr.rel (%p253) target = $region44
      $region43: #{tpu_custom_call.1} parent=5 // pred_region
        // Predicated region
        $region45: #{tpu_custom_call.1} parent=43 // pred_check
          %p256 = pneg %p37
        $region46: #{tpu_custom_call.1} parent=43 // pred_check_branch
          %258 = sbr.rel (%p256) target = $region48
        $region47: #{tpu_custom_call.1} parent=43 // pred_region
          %p259 = scmp.lt.s32.totalorder %s17, 1
          %s260 = scalar_select %p259, %s17, 1
          %s261 = smul.addr %s260, 2
          %s262 = smul.addr %s261, 8
          %s263 = scalar_lea.vmem %s0, %s262
        $region48: #{tpu_custom_call.1} parent=43 // pred_fallthru
          _
      $region44: #{tpu_custom_call.1} parent=5 // pred_fallthru
        _
      %p264 = scmp.le.s32.totalorder 1, %s17
      %p265 = scmp.lt.s32.totalorder %s17, 3
      %p266 = pnand %p264, %p265
      %p267 = pneg %p266
      // Predicated region
      $region49: #{tpu_custom_call.1} parent=5 // pred_check
        _
      $region50: #{tpu_custom_call.1} parent=5 // pred_check_branch
        %269 = sbr.rel (%p266) target = $region52
      $region51: #{tpu_custom_call.1} parent=5 // pred_region
        %s270 = ssub.s32 %s17, 1
        %p271 = scmp.lt.s32.totalorder %s22, 1
        %s272 = scalar_select %p271, %s22, 1
        %s273 = smul.addr %s272, 2
        %s274 = smul.addr %s273, 8
        %s275 = scalar_lea.vmem %s0, %s274
        %p276 = pneg %p43
        %p277 = pneg %p40
        %p278 = pneg %p64
        %p279 = pneg %p61
        %p280 = pneg %p85
        %p281 = pneg %p82
        %p282 = pneg %p106
        %p283 = pneg %p103
        %p284 = pneg %p127
        %p285 = pneg %p124
        %p286 = pneg %p148
        %p287 = pneg %p145
        %p288 = pneg %p169
        %p289 = pneg %p166
        %p290 = pneg %p190
        %p291 = pneg %p187
        %p292 = pneg %p216
        %p293 = pneg %p213
        %s294 = sand.u32 %s203, 1
        %s295 = scalar_lea.sflag [#allocation3], %s294
        %s296 = sand.u32 %s203, 1
        %s297 = smul.addr %s296, 16
        %s298 = scalar_lea.vmem [#allocation2], %s297
        %p299 = scmp.lt.s32.totalorder %s22, 1
        %s300 = scalar_select %p299, %s22, 1
        %s301 = smul.addr %s300, 2
        %s302 = smul.addr %s301, 8
        %s303 = scalar_lea.vmem %s0, %s302
        %v305 = vld [vmem:[%s303] sm:$0xff]
        %v306 = vld [vmem:[%s303 + $0x8] sm:$0xff]
        %v307 = vpack.c.bf16 %v306, %v305
        %v308 = vld [vmem:[%s1] sm:$0xf]
        %v309 = vld [vmem:[%s1 + $0x4] sm:$0xf]
        %v310 = vld [vmem:[%s1 + $0x8] sm:$0xf]
        %v311 = vld [vmem:[%s1 + $0xc] sm:$0xf]
        %v312 = vld [vmem:[%s1 + $0x10] sm:$0xf]
        %v313 = vld [vmem:[%s1 + $0x14] sm:$0xf]
        %v314 = vld [vmem:[%s1 + $0x18] sm:$0xf]
        %v315 = vld [vmem:[%s1 + $0x1c] sm:$0xf]
        %v324 = vunpack.c.l.b16 %v308
        %v325 = vunpack.c.l.b16 %v309
        %v326 = vunpack.c.l.b16 %v310
        %v327 = vunpack.c.l.b16 %v311
        %v328 = vunpack.c.l.b16 %v312
        %v329 = vunpack.c.l.b16 %v313
        %v330 = vunpack.c.l.b16 %v314
        %v331 = vunpack.c.l.b16 %v315
        %v332 = vpack.c.b16 %v325, %v324
        %v333 = vpack.c.b16 %v327, %v326
        %v334 = vpack.c.b16 %v329, %v328
        %v335 = vpack.c.b16 %v331, %v330
        %vm340 = vcmask 523264
        %v342 = vsel %vm340, %v307, 0
        %344 = vmatprep.subr.bf16.mxu0 0
        %345 = vmatpush1.bf16.msra.mxu0 %v332
        %346 = vmatprep.subr.bf16.mxu0 0
        %347 = vmatpush1.bf16.msra.mxu0 %v333
        %348 = vmatprep.subr.bf16.mxu0 0
        %349 = vmatpush1.bf16.msra.mxu0 %v334
        %350 = vmatprep.subr.bf16.mxu0 0
        %351 = vmatpush1.bf16.msra.mxu0 %v335
        %352 = vmatprep.subr.bf16.mxu0 0
        %353 = vmatpush1.bf16.msra.mxu0 0
        %354 = vmatprep.subr.bf16.mxu0 0
        %355 = vmatpush1.bf16.msra.mxu0 0
        %356 = vmatprep.subr.bf16.mxu0 0
        %357 = vmatpush1.bf16.msra.mxu0 0
        %358 = vmatprep.subr.bf16.mxu0 0
        %359 = vmatpush1.bf16.msra.mxu0 0
        %360 = vmatprep.subr.bf16.mxu0 0
        %361 = vmatpush1.bf16.msra.mxu0 0
        %362 = vmatprep.subr.bf16.mxu0 0
        %363 = vmatpush1.bf16.msra.mxu0 0
        %364 = vmatprep.subr.bf16.mxu0 0
        %365 = vmatpush1.bf16.msra.mxu0 0
        %366 = vmatprep.subr.bf16.mxu0 0
        %367 = vmatpush1.bf16.msra.mxu0 0
        %368 = vmatprep.subr.bf16.mxu0 0
        %369 = vmatpush1.bf16.msra.mxu0 0
        %370 = vmatprep.subr.bf16.mxu0 0
        %371 = vmatpush1.bf16.msra.mxu0 0
        %372 = vmatprep.subr.bf16.mxu0 0
        %373 = vmatpush1.bf16.msra.mxu0 0
        %374 = vmatprep.subr.bf16.mxu0 0
        %375 = vmatpush1.bf16.msra.mxu0 0
        %376 = vmatprep.mubr.bf16.mxu0 0
        %377 = vmatmul.mubr.bf16.gmra.mrb[0].mxu0 %v342
        %v378 = vpop.f32.mrb[0].mxu0
        %v379 = vadd.f32 0.0, %v378
        %v380 = vpop.f32.mrb[0].mxu0
        %v381 = vpop.f32.mrb[0].mxu0
        %v382 = vadd.f32 0.0, %v381
        %v383 = vpop.f32.mrb[0].mxu0
        %384 = vdwg.mxu0
        %v385 = vld [vmem:[%s2] sm:$0xf]
        %v386 = vld [vmem:[%s2 + $0x4] sm:$0xf]
        %v387 = vld [vmem:[%s2 + $0x8] sm:$0xf]
        %v388 = vld [vmem:[%s2 + $0xc] sm:$0xf]
        %v389 = vld [vmem:[%s2 + $0x10] sm:$0xf]
        %v390 = vld [vmem:[%s2 + $0x14] sm:$0xf]
        %v391 = vld [vmem:[%s2 + $0x18] sm:$0xf]
        %v392 = vld [vmem:[%s2 + $0x1c] sm:$0xf]
        %v393 = vld [vmem:[%s2 + $0x20] sm:$0xf]
        %v394 = vld [vmem:[%s2 + $0x24] sm:$0xf]
        %v395 = vld [vmem:[%s2 + $0x28] sm:$0xf]
        %v396 = vld [vmem:[%s2 + $0x2c] sm:$0xf]
        %v397 = vld [vmem:[%s2 + $0x30] sm:$0xf]
        %v398 = vld [vmem:[%s2 + $0x34] sm:$0xf]
        %v399 = vld [vmem:[%s2 + $0x38] sm:$0xf]
        %v400 = vld [vmem:[%s2 + $0x3c] sm:$0xf]
        %v417 = vunpack.c.l.b16 %v385
        %v418 = vunpack.c.l.b16 %v386
        %v419 = vunpack.c.l.b16 %v387
        %v420 = vunpack.c.l.b16 %v388
        %v421 = vunpack.c.l.b16 %v389
        %v422 = vunpack.c.l.b16 %v390
        %v423 = vunpack.c.l.b16 %v391
        %v424 = vunpack.c.l.b16 %v392
        %v425 = vunpack.c.l.b16 %v393
        %v426 = vunpack.c.l.b16 %v394
        %v427 = vunpack.c.l.b16 %v395
        %v428 = vunpack.c.l.b16 %v396
        %v429 = vunpack.c.l.b16 %v397
        %v430 = vunpack.c.l.b16 %v398
        %v431 = vunpack.c.l.b16 %v399
        %v432 = vunpack.c.l.b16 %v400
        %v433 = vpack.c.b16 %v418, %v417
        %v434 = vpack.c.b16 %v420, %v419
        %v435 = vpack.c.b16 %v422, %v421
        %v436 = vpack.c.b16 %v424, %v423
        %v437 = vpack.c.b16 %v426, %v425
        %v438 = vpack.c.b16 %v428, %v427
        %v439 = vpack.c.b16 %v430, %v429
        %v440 = vpack.c.b16 %v432, %v431
        %v442 = vsel %vm340, %v433, 0
        %v445 = vsel %vm340, %v434, 0
        %v448 = vsel %vm340, %v435, 0
        %v451 = vsel %vm340, %v436, 0
        %v454 = vsel %vm340, %v437, 0
        %v457 = vsel %vm340, %v438, 0
        %v460 = vsel %vm340, %v439, 0
        %v463 = vsel %vm340, %v440, 0
        %465 = vmatprep.subr.bf16.mxu0 0
        %466 = vmatpush1.bf16.xpose.msra.mxu0 %v342
        %467 = vmatprep.subr.bf16.mxu0 0
        %468 = vmatpush1.bf16.xpose.msra.mxu0 0
        %469 = vmatprep.subr.bf16.mxu0 0
        %470 = vmatpush1.bf16.xpose.msra.mxu0 0
        %471 = vmatprep.subr.bf16.mxu0 0
        %472 = vmatpush1.bf16.xpose.msra.mxu0 0
        %473 = vmatprep.subr.bf16.mxu0 0
        %474 = vmatpush1.bf16.xpose.msra.mxu0 0
        %475 = vmatprep.subr.bf16.mxu0 0
        %476 = vmatpush1.bf16.xpose.msra.mxu0 0
        %477 = vmatprep.subr.bf16.mxu0 0
        %478 = vmatpush1.bf16.xpose.msra.mxu0 0
        %479 = vmatprep.subr.bf16.mxu0 0
        %480 = vmatpush1.bf16.xpose.msra.mxu0 0
        %481 = vmatprep.subr.bf16.mxu0 0
        %482 = vmatpush1.bf16.xpose.msra.mxu0 0
        %483 = vmatprep.subr.bf16.mxu0 0
        %484 = vmatpush1.bf16.xpose.msra.mxu0 0
        %485 = vmatprep.subr.bf16.mxu0 0
        %486 = vmatpush1.bf16.xpose.msra.mxu0 0
        %487 = vmatprep.subr.bf16.mxu0 0
        %488 = vmatpush1.bf16.xpose.msra.mxu0 0
        %489 = vmatprep.subr.bf16.mxu0 0
        %490 = vmatpush1.bf16.xpose.msra.mxu0 0
        %491 = vmatprep.subr.bf16.mxu0 0
        %492 = vmatpush1.bf16.xpose.msra.mxu0 0
        %493 = vmatprep.subr.bf16.mxu0 0
        %494 = vmatpush1.bf16.xpose.msra.mxu0 0
        %495 = vmatprep.subr.bf16.mxu0 0
        %496 = vmatpush1.bf16.xpose.msra.mxu0 0
        %497 = vmatprep.mubr.bf16.mxu0 0
        %498 = vmatmul.mubr.bf16.gmra.mrb[0].mxu0 %v442
        %v499 = vpop.f32.mrb[0].mxu0
        %v500 = vadd.f32 0.0, %v499
        %v501 = vpop.f32.mrb[0].mxu0
        %v502 = vpop.f32.mrb[0].mxu0
        %v503 = vadd.f32 0.0, %v502
        %v504 = vpop.f32.mrb[0].mxu0
        %505 = vmatprep.mubr.bf16.mxu0 0
        %506 = vmatmul.mubr.bf16.gmra.mrb[0].mxu0 %v445
        %v507 = vpop.f32.mrb[0].mxu0
        %v508 = vadd.f32 0.0, %v507
        %v509 = vpop.f32.mrb[0].mxu0
        %v510 = vpop.f32.mrb[0].mxu0
        %v511 = vadd.f32 0.0, %v510
        %v512 = vpop.f32.mrb[0].mxu0
        %513 = vmatprep.mubr.bf16.mxu0 0
        %514 = vmatmul.mubr.bf16.gmra.mrb[0].mxu0 %v448
        %v515 = vpop.f32.mrb[0].mxu0
        %v516 = vadd.f32 0.0, %v515
        %v517 = vpop.f32.mrb[0].mxu0
        %v518 = vpop.f32.mrb[0].mxu0
        %v519 = vadd.f32 0.0, %v518
        %v520 = vpop.f32.mrb[0].mxu0
        %521 = vmatprep.mubr.bf16.mxu0 0
        %522 = vmatmul.mubr.bf16.gmra.mrb[0].mxu0 %v451
        %v523 = vpop.f32.mrb[0].mxu0
        %v524 = vadd.f32 0.0, %v523
        %v525 = vpop.f32.mrb[0].mxu0
        %v526 = vpop.f32.mrb[0].mxu0
        %v527 = vadd.f32 0.0, %v526
        %v528 = vpop.f32.mrb[0].mxu0
        %529 = vmatprep.mubr.bf16.mxu0 0
        %530 = vmatmul.mubr.bf16.gmra.mrb[0].mxu0 %v454
        %v531 = vpop.f32.mrb[0].mxu0
        %v532 = vadd.f32 0.0, %v531
        %v533 = vpop.f32.mrb[0].mxu0
        %v534 = vpop.f32.mrb[0].mxu0
        %v535 = vadd.f32 0.0, %v534
        %v536 = vpop.f32.mrb[0].mxu0
        %537 = vmatprep.mubr.bf16.mxu0 0
        %538 = vmatmul.mubr.bf16.gmra.mrb[0].mxu0 %v457
        %v539 = vpop.f32.mrb[0].mxu0
        %v540 = vadd.f32 0.0, %v539
        %v541 = vpop.f32.mrb[0].mxu0
        %v542 = vpop.f32.mrb[0].mxu0
        %v543 = vadd.f32 0.0, %v542
        %v544 = vpop.f32.mrb[0].mxu0
        %545 = vmatprep.mubr.bf16.mxu0 0
        %546 = vmatmul.mubr.bf16.gmra.mrb[0].mxu0 %v460
        %v547 = vpop.f32.mrb[0].mxu0
        %v548 = vadd.f32 0.0, %v547
        %v549 = vpop.f32.mrb[0].mxu0
        %v550 = vpop.f32.mrb[0].mxu0
        %v551 = vadd.f32 0.0, %v550
        %v552 = vpop.f32.mrb[0].mxu0
        %553 = vmatprep.mubr.bf16.mxu0 0
        %554 = vmatmul.mubr.bf16.gmra.mrb[0].mxu0 %v463
        %v555 = vpop.f32.mrb[0].mxu0
        %v556 = vadd.f32 0.0, %v555
        %v557 = vpop.f32.mrb[0].mxu0
        %v558 = vpop.f32.mrb[0].mxu0
        %v559 = vadd.f32 0.0, %v558
        %v560 = vpop.f32.mrb[0].mxu0
        %561 = vdwg.mxu0
        %v562 = vpack.c.bf16 %v382, %v379
        %v563 = vpack.c.bf16 %v503, %v500
        %vm564 = vcmask 130048
        %v566 = vsel %vm564, %v562, 0
        %568 = vmatprep.subr.bf16.mxu0 0
        %569 = vmatpush1.bf16.msra.mxu0 %v563
        %570 = vmatprep.subr.bf16.mxu0 0
        %571 = vmatpush1.bf16.msra.mxu0 0
        %572 = vmatprep.subr.bf16.mxu0 0
        %573 = vmatpush1.bf16.msra.mxu0 0
        %574 = vmatprep.subr.bf16.mxu0 0
        %575 = vmatpush1.bf16.msra.mxu0 0
        %576 = vmatprep.subr.bf16.mxu0 0
        %577 = vmatpush1.bf16.msra.mxu0 0
        %578 = vmatprep.subr.bf16.mxu0 0
        %579 = vmatpush1.bf16.msra.mxu0 0
        %580 = vmatprep.subr.bf16.mxu0 0
        %581 = vmatpush1.bf16.msra.mxu0 0
        %582 = vmatprep.subr.bf16.mxu0 0
        %583 = vmatpush1.bf16.msra.mxu0 0
        %584 = vmatprep.subr.bf16.mxu0 0
        %585 = vmatpush1.bf16.msra.mxu0 0
        %586 = vmatprep.subr.bf16.mxu0 0
        %587 = vmatpush1.bf16.msra.mxu0 0
        %588 = vmatprep.subr.bf16.mxu0 0
        %589 = vmatpush1.bf16.msra.mxu0 0
        %590 = vmatprep.subr.bf16.mxu0 0
        %591 = vmatpush1.bf16.msra.mxu0 0
        %592 = vmatprep.subr.bf16.mxu0 0
        %593 = vmatpush1.bf16.msra.mxu0 0
        %594 = vmatprep.subr.bf16.mxu0 0
        %595 = vmatpush1.bf16.msra.mxu0 0
        %596 = vmatprep.subr.bf16.mxu0 0
        %597 = vmatpush1.bf16.msra.mxu0 0
        %598 = vmatprep.subr.bf16.mxu0 0
        %599 = vmatpush1.bf16.msra.mxu0 0
        %600 = vmatprep.mubr.bf16.mxu0 0
        %601 = vmatmul.mubr.bf16.gmra.mrb[0].mxu0 %v566
        %v602 = vpop.f32.mrb[0].mxu0
        %v603 = vadd.f32 0.0, %v602
        %v604 = vpop.f32.mrb[0].mxu0
        %v605 = vpop.f32.mrb[0].mxu0
        %v606 = vadd.f32 0.0, %v605
        %v607 = vpop.f32.mrb[0].mxu0
        %608 = vdwg.mxu0
        %v609 = vsel %vm564, %v603, -inf
        %610 = vmax.xlane.f32.xlu0 %v609
        %v611 = vpop.xlane.xlu0 %610
        %v612 = vsel %vm564, %v606, -inf
        %613 = vmax.xlane.f32.xlu0 %v612
        %v614 = vpop.xlane.xlu0 %613
        %v615 = vsub.f32 %v603, %v611
        %v616 = vsub.f32 %v606, %v614
        %v617 = vmul.f32 %v615, 1.442695
        %v618 = vpow.pop %v617
        %v619 = vmul.f32 %v616, 1.442695
        %v620 = vpow.pop %v619
        %v621 = vsel %vm564, %v618, 0.0
        %622 = vadd.xlane.f32.xlu0 %v621
        %v623 = vpop.xlane.xlu0 %622
        %v624 = vsel %vm564, %v620, 0.0
        %625 = vadd.xlane.f32.xlu0 %v624
        %v626 = vpop.xlane.xlu0 %625
        %v627 = vrcp.pop %v623
        %v628 = vrcp.pop %v626
        %v629 = vmul.f32 %v618, %v627
        %v630 = vmul.f32 %v620, %v628
        %v631 = vpack.c.bf16 %v630, %v629
        %v632 = vpack.c.bf16 %v535, %v532
        %v634 = vsel %vm564, %v631, 0
        %v637 = vsel %vm564, %v632, 0
        %639 = vmatprep.subr.bf16.mxu0 0
        %640 = vmatpush1.bf16.xpose.msra.mxu0 %v637
        %641 = vmatprep.subr.bf16.mxu0 0
        %642 = vmatpush1.bf16.xpose.msra.mxu0 0
        %643 = vmatprep.subr.bf16.mxu0 0
        %644 = vmatpush1.bf16.xpose.msra.mxu0 0
        %645 = vmatprep.subr.bf16.mxu0 0
        %646 = vmatpush1.bf16.xpose.msra.mxu0 0
        %647 = vmatprep.subr.bf16.mxu0 0
        %648 = vmatpush1.bf16.xpose.msra.mxu0 0
        %649 = vmatprep.subr.bf16.mxu0 0
        %650 = vmatpush1.bf16.xpose.msra.mxu0 0
        %651 = vmatprep.subr.bf16.mxu0 0
        %652 = vmatpush1.bf16.xpose.msra.mxu0 0
        %653 = vmatprep.subr.bf16.mxu0 0
        %654 = vmatpush1.bf16.xpose.msra.mxu0 0
        %655 = vmatprep.subr.bf16.mxu0 0
        %656 = vmatpush1.bf16.xpose.msra.mxu0 0
        %657 = vmatprep.subr.bf16.mxu0 0
        %658 = vmatpush1.bf16.xpose.msra.mxu0 0
        %659 = vmatprep.subr.bf16.mxu0 0
        %660 = vmatpush1.bf16.xpose.msra.mxu0 0
        %661 = vmatprep.subr.bf16.mxu0 0
        %662 = vmatpush1.bf16.xpose.msra.mxu0 0
        %663 = vmatprep.subr.bf16.mxu0 0
        %664 = vmatpush1.bf16.xpose.msra.mxu0 0
        %665 = vmatprep.subr.bf16.mxu0 0
        %666 = vmatpush1.bf16.xpose.msra.mxu0 0
        %667 = vmatprep.subr.bf16.mxu0 0
        %668 = vmatpush1.bf16.xpose.msra.mxu0 0
        %669 = vmatprep.subr.bf16.mxu0 0
        %670 = vmatpush1.bf16.xpose.msra.mxu0 0
        %671 = vmatprep.mubr.bf16.mxu0 0
        %672 = vmatmul.mubr.bf16.gmra.mrb[0].mxu0 %v634
        %v673 = vpop.f32.mrb[0].mxu0
        %v674 = vadd.f32 0.0, %v673
        %v675 = vpop.f32.mrb[0].mxu0
        %v676 = vpop.f32.mrb[0].mxu0
        %v677 = vadd.f32 0.0, %v676
        %v678 = vpop.f32.mrb[0].mxu0
        %679 = vdwg.mxu0
        %v680 = vpack.c.bf16 %v511, %v508
        %682 = vrot.lane.b32.xlu0 %v562, 112
        %v683 = vpop.permute.xlu0 %682
        %v685 = vsel %vm564, %v683, 0
        %687 = vmatprep.subr.bf16.mxu0 0
        %688 = vmatpush1.bf16.msra.mxu0 %v680
        %689 = vmatprep.subr.bf16.mxu0 0
        %690 = vmatpush1.bf16.msra.mxu0 0
        %691 = vmatprep.subr.bf16.mxu0 0
        %692 = vmatpush1.bf16.msra.mxu0 0
        %693 = vmatprep.subr.bf16.mxu0 0
        %694 = vmatpush1.bf16.msra.mxu0 0
        %695 = vmatprep.subr.bf16.mxu0 0
        %696 = vmatpush1.bf16.msra.mxu0 0
        %697 = vmatprep.subr.bf16.mxu0 0
        %698 = vmatpush1.bf16.msra.mxu0 0
        %699 = vmatprep.subr.bf16.mxu0 0
        %700 = vmatpush1.bf16.msra.mxu0 0
        %701 = vmatprep.subr.bf16.mxu0 0
        %702 = vmatpush1.bf16.msra.mxu0 0
        %703 = vmatprep.subr.bf16.mxu0 0
        %704 = vmatpush1.bf16.msra.mxu0 0
        %705 = vmatprep.subr.bf16.mxu0 0
        %706 = vmatpush1.bf16.msra.mxu0 0
        %707 = vmatprep.subr.bf16.mxu0 0
        %708 = vmatpush1.bf16.msra.mxu0 0
        %709 = vmatprep.subr.bf16.mxu0 0
        %710 = vmatpush1.bf16.msra.mxu0 0
        %711 = vmatprep.subr.bf16.mxu0 0
        %712 = vmatpush1.bf16.msra.mxu0 0
        %713 = vmatprep.subr.bf16.mxu0 0
        %714 = vmatpush1.bf16.msra.mxu0 0
        %715 = vmatprep.subr.bf16.mxu0 0
        %716 = vmatpush1.bf16.msra.mxu0 0
        %717 = vmatprep.subr.bf16.mxu0 0
        %718 = vmatpush1.bf16.msra.mxu0 0
        %719 = vmatprep.mubr.bf16.mxu0 0
        %720 = vmatmul.mubr.bf16.gmra.mrb[0].mxu0 %v685
        %v721 = vpop.f32.mrb[0].mxu0
        %v722 = vadd.f32 0.0, %v721
        %v723 = vpop.f32.mrb[0].mxu0
        %v724 = vpop.f32.mrb[0].mxu0
        %v725 = vadd.f32 0.0, %v724
        %v726 = vpop.f32.mrb[0].mxu0
        %727 = vdwg.mxu0
        %v728 = vsel %vm564, %v722, -inf
        %729 = vmax.xlane.f32.xlu0 %v728
        %v730 = vpop.xlane.xlu0 %729
        %v731 = vsel %vm564, %v725, -inf
        %732 = vmax.xlane.f32.xlu0 %v731
        %v733 = vpop.xlane.xlu0 %732
        %v734 = vsub.f32 %v722, %v730
        %v735 = vsub.f32 %v725, %v733
        %v736 = vmul.f32 %v734, 1.442695
        %v737 = vpow.pop %v736
        %v738 = vmul.f32 %v735, 1.442695
        %v739 = vpow.pop %v738
        %v740 = vsel %vm564, %v737, 0.0
        %741 = vadd.xlane.f32.xlu0 %v740
        %v742 = vpop.xlane.xlu0 %741
        %v743 = vsel %vm564, %v739, 0.0
        %744 = vadd.xlane.f32.xlu0 %v743
        %v745 = vpop.xlane.xlu0 %744
        %v746 = vrcp.pop %v742
        %v747 = vrcp.pop %v745
        %v748 = vmul.f32 %v737, %v746
        %v749 = vmul.f32 %v739, %v747
        %v750 = vpack.c.bf16 %v749, %v748
        %v751 = vpack.c.bf16 %v543, %v540
        %v753 = vsel %vm564, %v750, 0
        %v756 = vsel %vm564, %v751, 0
        %758 = vmatprep.subr.bf16.mxu0 0
        %759 = vmatpush1.bf16.xpose.msra.mxu0 %v756
        %760 = vmatprep.subr.bf16.mxu0 0
        %761 = vmatpush1.bf16.xpose.msra.mxu0 0
        %762 = vmatprep.subr.bf16.mxu0 0
        %763 = vmatpush1.bf16.xpose.msra.mxu0 0
        %764 = vmatprep.subr.bf16.mxu0 0
        %765 = vmatpush1.bf16.xpose.msra.mxu0 0
        %766 = vmatprep.subr.bf16.mxu0 0
        %767 = vmatpush1.bf16.xpose.msra.mxu0 0
        %768 = vmatprep.subr.bf16.mxu0 0
        %769 = vmatpush1.bf16.xpose.msra.mxu0 0
        %770 = vmatprep.subr.bf16.mxu0 0
        %771 = vmatpush1.bf16.xpose.msra.mxu0 0
        %772 = vmatprep.subr.bf16.mxu0 0
        %773 = vmatpush1.bf16.xpose.msra.mxu0 0
        %774 = vmatprep.subr.bf16.mxu0 0
        %775 = vmatpush1.bf16.xpose.msra.mxu0 0
        %776 = vmatprep.subr.bf16.mxu0 0
        %777 = vmatpush1.bf16.xpose.msra.mxu0 0
        %778 = vmatprep.subr.bf16.mxu0 0
        %779 = vmatpush1.bf16.xpose.msra.mxu0 0
        %780 = vmatprep.subr.bf16.mxu0 0
        %781 = vmatpush1.bf16.xpose.msra.mxu0 0
        %782 = vmatprep.subr.bf16.mxu0 0
        %783 = vmatpush1.bf16.xpose.msra.mxu0 0
        %784 = vmatprep.subr.bf16.mxu0 0
        %785 = vmatpush1.bf16.xpose.msra.mxu0 0
        %786 = vmatprep.subr.bf16.mxu0 0
        %787 = vmatpush1.bf16.xpose.msra.mxu0 0
        %788 = vmatprep.subr.bf16.mxu0 0
        %789 = vmatpush1.bf16.xpose.msra.mxu0 0
        %790 = vmatprep.mubr.bf16.mxu0 0
        %791 = vmatmul.mubr.bf16.gmra.mrb[0].mxu0 %v753
        %v792 = vpop.f32.mrb[0].mxu0
        %v793 = vadd.f32 0.0, %v792
        %v794 = vpop.f32.mrb[0].mxu0
        %v795 = vpop.f32.mrb[0].mxu0
        %v796 = vadd.f32 0.0, %v795
        %v797 = vpop.f32.mrb[0].mxu0
        %798 = vdwg.mxu0
        %v799 = vpack.c.bf16 %v519, %v516
        %800 = vrot.lane.b32.xlu0 %v562, 96
        %v801 = vpop.permute.xlu0 %800
        %v803 = vsel %vm564, %v801, 0
        %805 = vmatprep.subr.bf16.mxu0 0
        %806 = vmatpush1.bf16.msra.mxu0 %v799
        %807 = vmatprep.subr.bf16.mxu0 0
        %808 = vmatpush1.bf16.msra.mxu0 0
        %809 = vmatprep.subr.bf16.mxu0 0
        %810 = vmatpush1.bf16.msra.mxu0 0
        %811 = vmatprep.subr.bf16.mxu0 0
        %812 = vmatpush1.bf16.msra.mxu0 0
        %813 = vmatprep.subr.bf16.mxu0 0
        %814 = vmatpush1.bf16.msra.mxu0 0
        %815 = vmatprep.subr.bf16.mxu0 0
        %816 = vmatpush1.bf16.msra.mxu0 0
        %817 = vmatprep.subr.bf16.mxu0 0
        %818 = vmatpush1.bf16.msra.mxu0 0
        %819 = vmatprep.subr.bf16.mxu0 0
        %820 = vmatpush1.bf16.msra.mxu0 0
        %821 = vmatprep.subr.bf16.mxu0 0
        %822 = vmatpush1.bf16.msra.mxu0 0
        %823 = vmatprep.subr.bf16.mxu0 0
        %824 = vmatpush1.bf16.msra.mxu0 0
        %825 = vmatprep.subr.bf16.mxu0 0
        %826 = vmatpush1.bf16.msra.mxu0 0
        %827 = vmatprep.subr.bf16.mxu0 0
        %828 = vmatpush1.bf16.msra.mxu0 0
        %829 = vmatprep.subr.bf16.mxu0 0
        %830 = vmatpush1.bf16.msra.mxu0 0
        %831 = vmatprep.subr.bf16.mxu0 0
        %832 = vmatpush1.bf16.msra.mxu0 0
        %833 = vmatprep.subr.bf16.mxu0 0
        %834 = vmatpush1.bf16.msra.mxu0 0
        %835 = vmatprep.subr.bf16.mxu0 0
        %836 = vmatpush1.bf16.msra.mxu0 0
        %837 = vmatprep.mubr.bf16.mxu0 0
        %838 = vmatmul.mubr.bf16.gmra.mrb[0].mxu0 %v803
        %v839 = vpop.f32.mrb[0].mxu0
        %v840 = vadd.f32 0.0, %v839
        %v841 = vpop.f32.mrb[0].mxu0
        %v842 = vpop.f32.mrb[0].mxu0
        %v843 = vadd.f32 0.0, %v842
        %v844 = vpop.f32.mrb[0].mxu0
        %845 = vdwg.mxu0
        %v846 = vsel %vm564, %v840, -inf
        %847 = vmax.xlane.f32.xlu0 %v846
        %v848 = vpop.xlane.xlu0 %847
        %v849 = vsel %vm564, %v843, -inf
        %850 = vmax.xlane.f32.xlu0 %v849
        %v851 = vpop.xlane.xlu0 %850
        %v852 = vsub.f32 %v840, %v848
        %v853 = vsub.f32 %v843, %v851
        %v854 = vmul.f32 %v852, 1.442695
        %v855 = vpow.pop %v854
        %v856 = vmul.f32 %v853, 1.442695
        %v857 = vpow.pop %v856
        %v858 = vsel %vm564, %v855, 0.0
        %859 = vadd.xlane.f32.xlu0 %v858
        %v860 = vpop.xlane.xlu0 %859
        %v861 = vsel %vm564, %v857, 0.0
        %862 = vadd.xlane.f32.xlu0 %v861
        %v863 = vpop.xlane.xlu0 %862
        %v864 = vrcp.pop %v860
        %v865 = vrcp.pop %v863
        %v866 = vmul.f32 %v855, %v864
        %v867 = vmul.f32 %v857, %v865
        %v868 = vpack.c.bf16 %v867, %v866
        %v869 = vpack.c.bf16 %v551, %v548
        %v871 = vsel %vm564, %v868, 0
        %v874 = vsel %vm564, %v869, 0
        %876 = vmatprep.subr.bf16.mxu0 0
        %877 = vmatpush1.bf16.xpose.msra.mxu0 %v874
        %878 = vmatprep.subr.bf16.mxu0 0
        %879 = vmatpush1.bf16.xpose.msra.mxu0 0
        %880 = vmatprep.subr.bf16.mxu0 0
        %881 = vmatpush1.bf16.xpose.msra.mxu0 0
        %882 = vmatprep.subr.bf16.mxu0 0
        %883 = vmatpush1.bf16.xpose.msra.mxu0 0
        %884 = vmatprep.subr.bf16.mxu0 0
        %885 = vmatpush1.bf16.xpose.msra.mxu0 0
        %886 = vmatprep.subr.bf16.mxu0 0
        %887 = vmatpush1.bf16.xpose.msra.mxu0 0
        %888 = vmatprep.subr.bf16.mxu0 0
        %889 = vmatpush1.bf16.xpose.msra.mxu0 0
        %890 = vmatprep.subr.bf16.mxu0 0
        %891 = vmatpush1.bf16.xpose.msra.mxu0 0
        %892 = vmatprep.subr.bf16.mxu0 0
        %893 = vmatpush1.bf16.xpose.msra.mxu0 0
        %894 = vmatprep.subr.bf16.mxu0 0
        %895 = vmatpush1.bf16.xpose.msra.mxu0 0
        %896 = vmatprep.subr.bf16.mxu0 0
        %897 = vmatpush1.bf16.xpose.msra.mxu0 0
        %898 = vmatprep.subr.bf16.mxu0 0
        %899 = vmatpush1.bf16.xpose.msra.mxu0 0
        %900 = vmatprep.subr.bf16.mxu0 0
        %901 = vmatpush1.bf16.xpose.msra.mxu0 0
        %902 = vmatprep.subr.bf16.mxu0 0
        %903 = vmatpush1.bf16.xpose.msra.mxu0 0
        %904 = vmatprep.subr.bf16.mxu0 0
        %905 = vmatpush1.bf16.xpose.msra.mxu0 0
        %906 = vmatprep.subr.bf16.mxu0 0
        %907 = vmatpush1.bf16.xpose.msra.mxu0 0
        %908 = vmatprep.mubr.bf16.mxu0 0
        %909 = vmatmul.mubr.bf16.gmra.mrb[0].mxu0 %v871
        %v910 = vpop.f32.mrb[0].mxu0
        %v911 = vadd.f32 0.0, %v910
        %v912 = vpop.f32.mrb[0].mxu0
        %v913 = vpop.f32.mrb[0].mxu0
        %v914 = vadd.f32 0.0, %v913
        %v915 = vpop.f32.mrb[0].mxu0
        %916 = vdwg.mxu0
        %v917 = vpack.c.bf16 %v527, %v524
        %918 = vrot.lane.b32.xlu0 %v562, 80
        %v919 = vpop.permute.xlu0 %918
        %v921 = vsel %vm564, %v919, 0
        %923 = vmatprep.subr.bf16.mxu0 0
        %924 = vmatpush1.bf16.msra.mxu0 %v917
        %925 = vmatprep.subr.bf16.mxu0 0
        %926 = vmatpush1.bf16.msra.mxu0 0
        %927 = vmatprep.subr.bf16.mxu0 0
        %928 = vmatpush1.bf16.msra.mxu0 0
        %929 = vmatprep.subr.bf16.mxu0 0
        %930 = vmatpush1.bf16.msra.mxu0 0
        %931 = vmatprep.subr.bf16.mxu0 0
        %932 = vmatpush1.bf16.msra.mxu0 0
        %933 = vmatprep.subr.bf16.mxu0 0
        %934 = vmatpush1.bf16.msra.mxu0 0
        %935 = vmatprep.subr.bf16.mxu0 0
        %936 = vmatpush1.bf16.msra.mxu0 0
        %937 = vmatprep.subr.bf16.mxu0 0
        %938 = vmatpush1.bf16.msra.mxu0 0
        %939 = vmatprep.subr.bf16.mxu0 0
        %940 = vmatpush1.bf16.msra.mxu0 0
        %941 = vmatprep.subr.bf16.mxu0 0
        %942 = vmatpush1.bf16.msra.mxu0 0
        %943 = vmatprep.subr.bf16.mxu0 0
        %944 = vmatpush1.bf16.msra.mxu0 0
        %945 = vmatprep.subr.bf16.mxu0 0
        %946 = vmatpush1.bf16.msra.mxu0 0
        %947 = vmatprep.subr.bf16.mxu0 0
        %948 = vmatpush1.bf16.msra.mxu0 0
        %949 = vmatprep.subr.bf16.mxu0 0
        %950 = vmatpush1.bf16.msra.mxu0 0
        %951 = vmatprep.subr.bf16.mxu0 0
        %952 = vmatpush1.bf16.msra.mxu0 0
        %953 = vmatprep.subr.bf16.mxu0 0
        %954 = vmatpush1.bf16.msra.mxu0 0
        %955 = vmatprep.mubr.bf16.mxu0 0
        %956 = vmatmul.mubr.bf16.gmra.mrb[0].mxu0 %v921
        %v957 = vpop.f32.mrb[0].mxu0
        %v958 = vadd.f32 0.0, %v957
        %v959 = vpop.f32.mrb[0].mxu0
        %v960 = vpop.f32.mrb[0].mxu0
        %v961 = vadd.f32 0.0, %v960
        %v962 = vpop.f32.mrb[0].mxu0
        %963 = vdwg.mxu0
        %v964 = vsel %vm564, %v958, -inf
        %965 = vmax.xlane.f32.xlu0 %v964
        %v966 = vpop.xlane.xlu0 %965
        %v967 = vsel %vm564, %v961, -inf
        %968 = vmax.xlane.f32.xlu0 %v967
        %v969 = vpop.xlane.xlu0 %968
        %v970 = vsub.f32 %v958, %v966
        %v971 = vsub.f32 %v961, %v969
        %v972 = vmul.f32 %v970, 1.442695
        %v973 = vpow.pop %v972
        %v974 = vmul.f32 %v971, 1.442695
        %v975 = vpow.pop %v974
        %v976 = vsel %vm564, %v973, 0.0
        %977 = vadd.xlane.f32.xlu0 %v976
        %v978 = vpop.xlane.xlu0 %977
        %v979 = vsel %vm564, %v975, 0.0
        %980 = vadd.xlane.f32.xlu0 %v979
        %v981 = vpop.xlane.xlu0 %980
        %v982 = vrcp.pop %v978
        %v983 = vrcp.pop %v981
        %v984 = vmul.f32 %v973, %v982
        %v985 = vmul.f32 %v975, %v983
        %v986 = vpack.c.bf16 %v985, %v984
        %v987 = vpack.c.bf16 %v559, %v556
        %v989 = vsel %vm564, %v986, 0
        %v992 = vsel %vm564, %v987, 0
        %994 = vmatprep.subr.bf16.mxu0 0
        %995 = vmatpush1.bf16.xpose.msra.mxu0 %v992
        %996 = vmatprep.subr.bf16.mxu0 0
        %997 = vmatpush1.bf16.xpose.msra.mxu0 0
        %998 = vmatprep.subr.bf16.mxu0 0
        %999 = vmatpush1.bf16.xpose.msra.mxu0 0
        %1000 = vmatprep.subr.bf16.mxu0 0
        %1001 = vmatpush1.bf16.xpose.msra.mxu0 0
        %1002 = vmatprep.subr.bf16.mxu0 0
        %1003 = vmatpush1.bf16.xpose.msra.mxu0 0
        %1004 = vmatprep.subr.bf16.mxu0 0
        %1005 = vmatpush1.bf16.xpose.msra.mxu0 0
        %1006 = vmatprep.subr.bf16.mxu0 0
        %1007 = vmatpush1.bf16.xpose.msra.mxu0 0
        %1008 = vmatprep.subr.bf16.mxu0 0
        %1009 = vmatpush1.bf16.xpose.msra.mxu0 0
        %1010 = vmatprep.subr.bf16.mxu0 0
        %1011 = vmatpush1.bf16.xpose.msra.mxu0 0
        %1012 = vmatprep.subr.bf16.mxu0 0
        %1013 = vmatpush1.bf16.xpose.msra.mxu0 0
        %1014 = vmatprep.subr.bf16.mxu0 0
        %1015 = vmatpush1.bf16.xpose.msra.mxu0 0
        %1016 = vmatprep.subr.bf16.mxu0 0
        %1017 = vmatpush1.bf16.xpose.msra.mxu0 0
        %1018 = vmatprep.subr.bf16.mxu0 0
        %1019 = vmatpush1.bf16.xpose.msra.mxu0 0
        %1020 = vmatprep.subr.bf16.mxu0 0
        %1021 = vmatpush1.bf16.xpose.msra.mxu0 0
        %1022 = vmatprep.subr.bf16.mxu0 0
        %1023 = vmatpush1.bf16.xpose.msra.mxu0 0
        %1024 = vmatprep.subr.bf16.mxu0 0
        %1025 = vmatpush1.bf16.xpose.msra.mxu0 0
        %1026 = vmatprep.mubr.bf16.mxu0 0
        %1027 = vmatmul.mubr.bf16.gmra.mrb[0].mxu0 %v989
        %v1028 = vpop.f32.mrb[0].mxu0
        %v1029 = vadd.f32 0.0, %v1028
        %v1030 = vpop.f32.mrb[0].mxu0
        %v1031 = vpop.f32.mrb[0].mxu0
        %v1032 = vadd.f32 0.0, %v1031
        %v1033 = vpop.f32.mrb[0].mxu0
        %1034 = vdwg.mxu0
        %1037 = vrot.lane.b32.xlu0 %v793, 16
        %v1038 = vpop.permute.xlu0 %1037
        %1039 = vrot.lane.b32.xlu0 %v796, 16
        %v1040 = vpop.permute.xlu0 %1039
        %1045 = vrot.lane.b32.xlu0 %v911, 32
        %v1046 = vpop.permute.xlu0 %1045
        %1047 = vrot.lane.b32.xlu0 %v914, 32
        %v1048 = vpop.permute.xlu0 %1047
        %1053 = vrot.lane.b32.xlu0 %v1029, 48
        %v1054 = vpop.permute.xlu0 %1053
        %1055 = vrot.lane.b32.xlu0 %v1032, 48
        %v1056 = vpop.permute.xlu0 %1055
        %v1059 = vsel %vm564, %v674, %v1038
        %v1060 = vsel %vm564, %v677, %v1040
        %vm1061 = vcmask 261120
        %v1062 = vsel %vm1061, %v1059, %v1046
        %v1063 = vsel %vm1061, %v1060, %v1048
        %vm1064 = vcmask 392192
        %v1065 = vsel %vm1064, %v1062, %v1054
        %v1066 = vsel %vm1064, %v1063, %v1056
        %v1067 = vld [vmem:[%s7] sm:$0x1]
        %v1068 = vpack.c.bf16 %v1066, %v1065
        %v1069 = vld [vmem:[%s3] sm:$0xf]
        %v1070 = vld [vmem:[%s3 + $0x4] sm:$0xf]
        %v1071 = vld [vmem:[%s3 + $0x8] sm:$0xf]
        %v1072 = vld [vmem:[%s3 + $0xc] sm:$0xf]
        %v1073 = vld [vmem:[%s3 + $0x10] sm:$0xf]
        %v1074 = vld [vmem:[%s3 + $0x14] sm:$0xf]
        %v1075 = vld [vmem:[%s3 + $0x18] sm:$0xf]
        %v1076 = vld [vmem:[%s3 + $0x1c] sm:$0xf]
        %v1077 = vlaneseq
        %v1078 = vshrl.u32 %v1077, 7
        %v1079 = vsub.s32 0, %v1078
        %v1080 = vrot.slane %v1067, %v1079
        %v1089 = vunpack.c.l.b16 %v1069
        %v1090 = vunpack.c.l.b16 %v1070
        %v1091 = vunpack.c.l.b16 %v1071
        %v1092 = vunpack.c.l.b16 %v1072
        %v1093 = vunpack.c.l.b16 %v1073
        %v1094 = vunpack.c.l.b16 %v1074
        %v1095 = vunpack.c.l.b16 %v1075
        %v1096 = vunpack.c.l.b16 %v1076
        %v1097 = vpack.c.b16 %v1090, %v1089
        %v1098 = vpack.c.b16 %v1092, %v1091
        %v1099 = vpack.c.b16 %v1094, %v1093
        %v1100 = vpack.c.b16 %v1096, %v1095
        %v1106 = vsel %vm340, %v1068, 0
        %1108 = vmatprep.subr.bf16.mxu0 0
        %1109 = vmatpush1.bf16.msra.mxu0 %v1097
        %1110 = vmatprep.subr.bf16.mxu0 0
        %1111 = vmatpush1.bf16.msra.mxu0 %v1098
        %1112 = vmatprep.subr.bf16.mxu0 0
        %1113 = vmatpush1.bf16.msra.mxu0 %v1099
        %1114 = vmatprep.subr.bf16.mxu0 0
        %1115 = vmatpush1.bf16.msra.mxu0 %v1100
        %1116 = vmatprep.subr.bf16.mxu0 0
        %1117 = vmatpush1.bf16.msra.mxu0 0
        %1118 = vmatprep.subr.bf16.mxu0 0
        %1119 = vmatpush1.bf16.msra.mxu0 0
        %1120 = vmatprep.subr.bf16.mxu0 0
        %1121 = vmatpush1.bf16.msra.mxu0 0
        %1122 = vmatprep.subr.bf16.mxu0 0
        %1123 = vmatpush1.bf16.msra.mxu0 0
        %1124 = vmatprep.subr.bf16.mxu0 0
        %1125 = vmatpush1.bf16.msra.mxu0 0
        %1126 = vmatprep.subr.bf16.mxu0 0
        %1127 = vmatpush1.bf16.msra.mxu0 0
        %1128 = vmatprep.subr.bf16.mxu0 0
        %1129 = vmatpush1.bf16.msra.mxu0 0
        %1130 = vmatprep.subr.bf16.mxu0 0
        %1131 = vmatpush1.bf16.msra.mxu0 0
        %1132 = vmatprep.subr.bf16.mxu0 0
        %1133 = vmatpush1.bf16.msra.mxu0 0
        %1134 = vmatprep.subr.bf16.mxu0 0
        %1135 = vmatpush1.bf16.msra.mxu0 0
        %1136 = vmatprep.subr.bf16.mxu0 0
        %1137 = vmatpush1.bf16.msra.mxu0 0
        %1138 = vmatprep.subr.bf16.mxu0 0
        %1139 = vmatpush1.bf16.msra.mxu0 0
        %1140 = vmatprep.mubr.bf16.mxu0 0
        %1141 = vmatmul.mubr.bf16.gmra.mrb[0].mxu0 %v1106
        %v1142 = vpop.f32.mrb[0].mxu0
        %v1143 = vadd.f32 %v1080, %v1142
        %v1144 = vpop.f32.mrb[0].mxu0
        %v1145 = vpop.f32.mrb[0].mxu0
        %v1146 = vadd.f32 %v1080, %v1145
        %v1147 = vpop.f32.mrb[0].mxu0
        %1148 = vdwg.mxu0
        %v1149 = vld [vmem:[%s7 + $0x1] sm:$0x1]
        %v1150 = vld [vmem:[%s7 + $0x2] sm:$0x1]
        %v1151 = vadd.f32 %v305, %v1143
        %v1152 = vadd.f32 %v306, %v1146
        %v1153 = vsel %vm340, %v1151, 0.0
        %1154 = vadd.xlane.f32.xlu0 %v1153
        %v1155 = vpop.xlane.xlu0 %1154
        %v1156 = vsel %vm340, %v1152, 0.0
        %1157 = vadd.xlane.f32.xlu0 %v1156
        %v1158 = vpop.xlane.xlu0 %1157
        %v1159 = vrcp.pop 64.0
        %v1160 = vmul.f32 %v1155, %v1159
        %v1161 = vmul.f32 %v1158, %v1159
        %v1162 = vsub.f32 %v1151, %v1160
        %v1163 = vsub.f32 %v1152, %v1161
        %v1164 = vmul.f32 %v1162, %v1162
        %v1165 = vmul.f32 %v1163, %v1163
        %v1166 = vsel %vm340, %v1164, 0.0
        %1167 = vadd.xlane.f32.xlu0 %v1166
        %v1168 = vpop.xlane.xlu0 %1167
        %v1169 = vsel %vm340, %v1165, 0.0
        %1170 = vadd.xlane.f32.xlu0 %v1169
        %v1171 = vpop.xlane.xlu0 %1170
        %v1172 = vmul.f32 %v1168, %v1159
        %v1173 = vmul.f32 %v1171, %v1159
        %v1174 = vadd.f32 %v1172, 1e-05
        %v1175 = vadd.f32 %v1173, 1e-05
        %v1176 = vrsqrt.pop %v1174
        %v1177 = vrsqrt.pop %v1175
        %v1178 = vmul.f32 %v1162, %v1176
        %v1179 = vmul.f32 %v1163, %v1177
        %v1180 = vlaneseq
        %v1181 = vshrl.u32 %v1180, 7
        %v1182 = vsub.s32 0, %v1181
        %v1183 = vrot.slane %v1149, %v1182
        %v1184 = vmul.f32 %v1178, %v1183
        %v1185 = vmul.f32 %v1179, %v1183
        %v1186 = vlaneseq
        %v1187 = vshrl.u32 %v1186, 7
        %v1188 = vsub.s32 0, %v1187
        %v1189 = vrot.slane %v1150, %v1188
        %v1190 = vadd.f32 %v1184, %v1189
        %v1191 = vadd.f32 %v1185, %v1189
        %v1192 = vpack.c.bf16 %v1191, %v1190
        %v1193 = vld [vmem:[%s4] sm:$0xf]
        %v1194 = vld [vmem:[%s4 + $0x4] sm:$0xf]
        %v1195 = vld [vmem:[%s4 + $0x8] sm:$0xf]
        %v1196 = vld [vmem:[%s4 + $0xc] sm:$0xf]
        %v1197 = vld [vmem:[%s4 + $0x10] sm:$0xf]
        %v1198 = vld [vmem:[%s4 + $0x14] sm:$0xf]
        %v1199 = vld [vmem:[%s4 + $0x18] sm:$0xf]
        %v1200 = vld [vmem:[%s4 + $0x1c] sm:$0xf]
        %v1201 = vld [vmem:[%s6] sm:$0x1]
        %v1203 = vlaneseq
        %v1204 = vshrl.u32 %v1203, 7
        %v1205 = vsub.s32 0, %v1204
        %v1206 = vrot.slane %v1201, %v1205
        %v1216 = vunpack.c.l.b16 %v1193
        %v1217 = vunpack.c.l.b16 %v1194
        %v1218 = vunpack.c.l.b16 %v1195
        %v1219 = vunpack.c.l.b16 %v1196
        %v1220 = vunpack.c.l.b16 %v1197
        %v1221 = vunpack.c.l.b16 %v1198
        %v1222 = vunpack.c.l.b16 %v1199
        %v1223 = vunpack.c.l.b16 %v1200
        %v1224 = vpack.c.b16 %v1217, %v1216
        %v1225 = vpack.c.b16 %v1219, %v1218
        %v1226 = vpack.c.b16 %v1221, %v1220
        %v1227 = vpack.c.b16 %v1223, %v1222
        %v1233 = vsel %vm340, %v1192, 0
        %1235 = vmatprep.subr.bf16.mxu0 0
        %1236 = vmatpush1.bf16.msra.mxu0 %v1224
        %1237 = vmatprep.subr.bf16.mxu0 0
        %1238 = vmatpush1.bf16.msra.mxu0 %v1225
        %1239 = vmatprep.subr.bf16.mxu0 0
        %1240 = vmatpush1.bf16.msra.mxu0 %v1226
        %1241 = vmatprep.subr.bf16.mxu0 0
        %1242 = vmatpush1.bf16.msra.mxu0 %v1227
        %1243 = vmatprep.subr.bf16.mxu0 0
        %1244 = vmatpush1.bf16.msra.mxu0 0
        %1245 = vmatprep.subr.bf16.mxu0 0
        %1246 = vmatpush1.bf16.msra.mxu0 0
        %1247 = vmatprep.subr.bf16.mxu0 0
        %1248 = vmatpush1.bf16.msra.mxu0 0
        %1249 = vmatprep.subr.bf16.mxu0 0
        %1250 = vmatpush1.bf16.msra.mxu0 0
        %1251 = vmatprep.subr.bf16.mxu0 0
        %1252 = vmatpush1.bf16.msra.mxu0 0
        %1253 = vmatprep.subr.bf16.mxu0 0
        %1254 = vmatpush1.bf16.msra.mxu0 0
        %1255 = vmatprep.subr.bf16.mxu0 0
        %1256 = vmatpush1.bf16.msra.mxu0 0
        %1257 = vmatprep.subr.bf16.mxu0 0
        %1258 = vmatpush1.bf16.msra.mxu0 0
        %1259 = vmatprep.subr.bf16.mxu0 0
        %1260 = vmatpush1.bf16.msra.mxu0 0
        %1261 = vmatprep.subr.bf16.mxu0 0
        %1262 = vmatpush1.bf16.msra.mxu0 0
        %1263 = vmatprep.subr.bf16.mxu0 0
        %1264 = vmatpush1.bf16.msra.mxu0 0
        %1265 = vmatprep.subr.bf16.mxu0 0
        %1266 = vmatpush1.bf16.msra.mxu0 0
        %1267 = vmatprep.mubr.bf16.mxu0 0
        %1268 = vmatmul.mubr.bf16.gmra.mrb[0].mxu0 %v1233
        %v1269 = vpop.f32.mrb[0].mxu0
        %v1270 = vadd.f32 %v1206, %v1269
        %v1271 = vpop.f32.mrb[0].mxu0
        %v1272 = vpop.f32.mrb[0].mxu0
        %v1273 = vadd.f32 %v1206, %v1272
        %v1274 = vpop.f32.mrb[0].mxu0
        %1275 = vdwg.mxu0
        %v1276 = vmax.f32 %v1270, 0.0
        %v1277 = vmax.f32 %v1273, 0.0
        %v1278 = vpack.c.bf16 %v1277, %v1276
        %v1279 = vld [vmem:[%s5] sm:$0xf]
        %v1280 = vld [vmem:[%s5 + $0x4] sm:$0xf]
        %v1281 = vld [vmem:[%s5 + $0x8] sm:$0xf]
        %v1282 = vld [vmem:[%s5 + $0xc] sm:$0xf]
        %v1283 = vld [vmem:[%s5 + $0x10] sm:$0xf]
        %v1284 = vld [vmem:[%s5 + $0x14] sm:$0xf]
        %v1285 = vld [vmem:[%s5 + $0x18] sm:$0xf]
        %v1286 = vld [vmem:[%s5 + $0x1c] sm:$0xf]
        %v1287 = vld [vmem:[%s5 + $0x20] sm:$0xf]
        %v1288 = vld [vmem:[%s5 + $0x24] sm:$0xf]
        %v1289 = vld [vmem:[%s5 + $0x28] sm:$0xf]
        %v1290 = vld [vmem:[%s5 + $0x2c] sm:$0xf]
        %v1291 = vld [vmem:[%s5 + $0x30] sm:$0xf]
        %v1292 = vld [vmem:[%s5 + $0x34] sm:$0xf]
        %v1293 = vld [vmem:[%s5 + $0x38] sm:$0xf]
        %v1294 = vld [vmem:[%s5 + $0x3c] sm:$0xf]
        %v1295 = vld [vmem:[%s7 + $0x3] sm:$0x1]
        %v1296 = vlaneseq
        %v1297 = vshrl.u32 %v1296, 7
        %v1298 = vsub.s32 0, %v1297
        %v1299 = vrot.slane %v1295, %v1298
        %v1316 = vunpack.c.l.b16 %v1279
        %v1317 = vunpack.c.l.b16 %v1280
        %v1318 = vunpack.c.l.b16 %v1281
        %v1319 = vunpack.c.l.b16 %v1282
        %v1320 = vunpack.c.l.b16 %v1283
        %v1321 = vunpack.c.l.b16 %v1284
        %v1322 = vunpack.c.l.b16 %v1285
        %v1323 = vunpack.c.l.b16 %v1286
        %v1324 = vunpack.c.l.b16 %v1287
        %v1325 = vunpack.c.l.b16 %v1288
        %v1326 = vunpack.c.l.b16 %v1289
        %v1327 = vunpack.c.l.b16 %v1290
        %v1328 = vunpack.c.l.b16 %v1291
        %v1329 = vunpack.c.l.b16 %v1292
        %v1330 = vunpack.c.l.b16 %v1293
        %v1331 = vunpack.c.l.b16 %v1294
        %v1332 = vpack.c.b16 %v1317, %v1316
        %v1333 = vpack.c.b16 %v1319, %v1318
        %v1334 = vpack.c.b16 %v1321, %v1320
        %v1335 = vpack.c.b16 %v1323, %v1322
        %v1336 = vpack.c.b16 %v1325, %v1324
        %v1337 = vpack.c.b16 %v1327, %v1326
        %v1338 = vpack.c.b16 %v1329, %v1328
        %v1339 = vpack.c.b16 %v1331, %v1330
        %1348 = vmatprep.subr.bf16.mxu0 0
        %1349 = vmatpush1.bf16.msra.mxu0 %v1332
        %1350 = vmatprep.subr.bf16.mxu0 0
        %1351 = vmatpush1.bf16.msra.mxu0 %v1333
        %1352 = vmatprep.subr.bf16.mxu0 0
        %1353 = vmatpush1.bf16.msra.mxu0 %v1334
        %1354 = vmatprep.subr.bf16.mxu0 0
        %1355 = vmatpush1.bf16.msra.mxu0 %v1335
        %1356 = vmatprep.subr.bf16.mxu0 0
        %1357 = vmatpush1.bf16.msra.mxu0 %v1336
        %1358 = vmatprep.subr.bf16.mxu0 0
        %1359 = vmatpush1.bf16.msra.mxu0 %v1337
        %1360 = vmatprep.subr.bf16.mxu0 0
        %1361 = vmatpush1.bf16.msra.mxu0 %v1338
        %1362 = vmatprep.subr.bf16.mxu0 0
        %1363 = vmatpush1.bf16.msra.mxu0 %v1339
        %1364 = vmatprep.subr.bf16.mxu0 0
        %1365 = vmatpush1.bf16.msra.mxu0 0
        %1366 = vmatprep.subr.bf16.mxu0 0
        %1367 = vmatpush1.bf16.msra.mxu0 0
        %1368 = vmatprep.subr.bf16.mxu0 0
        %1369 = vmatpush1.bf16.msra.mxu0 0
        %1370 = vmatprep.subr.bf16.mxu0 0
        %1371 = vmatpush1.bf16.msra.mxu0 0
        %1372 = vmatprep.subr.bf16.mxu0 0
        %1373 = vmatpush1.bf16.msra.mxu0 0
        %1374 = vmatprep.subr.bf16.mxu0 0
        %1375 = vmatpush1.bf16.msra.mxu0 0
        %1376 = vmatprep.subr.bf16.mxu0 0
        %1377 = vmatpush1.bf16.msra.mxu0 0
        %1378 = vmatprep.subr.bf16.mxu0 0
        %1379 = vmatpush1.bf16.msra.mxu0 0
        %1380 = vmatprep.mubr.bf16.mxu0 0
        %1381 = vmatmul.mubr.bf16.gmra.mrb[0].mxu0 %v1278
        %v1382 = vpop.f32.mrb[0].mxu0
        %v1383 = vadd.f32 %v1299, %v1382
        %v1384 = vpop.f32.mrb[0].mxu0
        %v1385 = vpop.f32.mrb[0].mxu0
        %v1386 = vadd.f32 %v1299, %v1385
        %v1387 = vpop.f32.mrb[0].mxu0
        %1388 = vdwg.mxu0
        %v1389 = vld [vmem:[%s7 + $0x4] sm:$0x1]
        %v1390 = vld [vmem:[%s7 + $0x5] sm:$0x1]
        %v1391 = vadd.f32 %v1383, %v1190
        %v1392 = vadd.f32 %v1386, %v1191
        %v1393 = vsel %vm340, %v1391, 0.0
        %1394 = vadd.xlane.f32.xlu0 %v1393
        %v1395 = vpop.xlane.xlu0 %1394
        %v1396 = vsel %vm340, %v1392, 0.0
        %1397 = vadd.xlane.f32.xlu0 %v1396
        %v1398 = vpop.xlane.xlu0 %1397
        %v1399 = vmul.f32 %v1395, %v1159
        %v1400 = vmul.f32 %v1398, %v1159
        %v1401 = vsub.f32 %v1391, %v1399
        %v1402 = vsub.f32 %v1392, %v1400
        %v1403 = vmul.f32 %v1401, %v1401
        %v1404 = vmul.f32 %v1402, %v1402
        %v1405 = vsel %vm340, %v1403, 0.0
        %1406 = vadd.xlane.f32.xlu0 %v1405
        %v1407 = vpop.xlane.xlu0 %1406
        %v1408 = vsel %vm340, %v1404, 0.0
        %1409 = vadd.xlane.f32.xlu0 %v1408
        %v1410 = vpop.xlane.xlu0 %1409
        %v1411 = vmul.f32 %v1407, %v1159
        %v1412 = vmul.f32 %v1410, %v1159
        %v1413 = vadd.f32 %v1411, 1e-05
        %v1414 = vadd.f32 %v1412, 1e-05
        %v1415 = vrsqrt.pop %v1413
        %v1416 = vrsqrt.pop %v1414
        %v1417 = vmul.f32 %v1401, %v1415
        %v1418 = vmul.f32 %v1402, %v1416
        %v1419 = vlaneseq
        %v1420 = vshrl.u32 %v1419, 7
        %v1421 = vsub.s32 0, %v1420
        %v1422 = vrot.slane %v1389, %v1421
        %v1423 = vmul.f32 %v1417, %v1422
        %v1424 = vmul.f32 %v1418, %v1422
        %v1425 = vlaneseq
        %v1426 = vshrl.u32 %v1425, 7
        %v1427 = vsub.s32 0, %v1426
        %v1428 = vrot.slane %v1390, %v1427
        %v1429 = vadd.f32 %v1423, %v1428
        %v1430 = vadd.f32 %v1424, %v1428
        %1431 = vst.msk [vmem:[%s298] sm:$0xff] %vm340, %v1429
        %1432 = vst.msk [vmem:[%s298 + $0x8] sm:$0xff] %vm340, %v1430
        %s1433 = sand.u32 %s203, 1
        %s1434 = scalar_lea.sflag [#allocation3], %s1433
        %s1435 = sand.u32 %s203, 1
        %s1436 = smul.addr %s1435, 16
        %s1437 = scalar_lea.vmem [#allocation2], %s1436
        // Predicated region
        $region53: #{tpu_custom_call.1} parent=51 // pred_check
          %p1438 = pneg %p213
        $region54: #{tpu_custom_call.1} parent=51 // pred_check_branch
          %1440 = sbr.rel (%p1438) target = $region56
        $region55: #{tpu_custom_call.1} parent=51 // pred_region
          %s1442 = ssub.s32 256, 256
          %1443 = vsyncadd %s1434, %s1442
          %s1444 = smul.addr %s22, 2
          %s1445 = smul.addr %s1444, 128
          %s1446 = scalar_lea.hbm %s8, %s1445
          %s1447 = sshll.u32 %s1437, 4
          %s1448 = int_to_ptr.vmem [resolvable:$true] %s1447
          %1453 = dma.vmem_to_hbm [thread:$0]  %s1448, 256, %s1446, %s1434, 128, 128, 8
        $region56: #{tpu_custom_call.1} parent=51 // pred_fallthru
          _
      $region52: #{tpu_custom_call.1} parent=5 // pred_fallthru
        _
      %p1454 = scmp.le.s32.totalorder 2, %s17
      // Predicated region
      $region57: #{tpu_custom_call.1} parent=5 // pred_check
        %p1455 = pneg %p1454
      $region58: #{tpu_custom_call.1} parent=5 // pred_check_branch
        %1457 = sbr.rel (%p1455) target = $region60
      $region59: #{tpu_custom_call.1} parent=5 // pred_region
        %s1458 = ssub.s32 %s17, 2
        // Predicated region
        $region61: #{tpu_custom_call.1} parent=59 // pred_check
          %p1459 = pneg %p219
        $region62: #{tpu_custom_call.1} parent=59 // pred_check_branch
          %1461 = sbr.rel (%p1459) target = $region64
        $region63: #{tpu_custom_call.1} parent=59 // pred_region
          %s1462 = sand.u32 %s204, 1
          %s1463 = scalar_lea.sflag [#allocation3], %s1462
          %s1464 = sand.u32 %s204, 1
          %s1465 = smul.addr %s1464, 16
          %s1466 = scalar_lea.vmem [#allocation2], %s1465
          %1467 = dma.done %s1463, 256
        $region64: #{tpu_custom_call.1} parent=59 // pred_fallthru
          _
      $region60: #{tpu_custom_call.1} parent=5 // pred_fallthru
        _
    $region6: #{tpu_custom_call.1} parent=1 // loop_footer
      %s21 = sadd.s32 1, %s17
    $region7: #{tpu_custom_call.1} parent=1 // loop_footer_branch
      %16 = sbr.rel target = $region3
    $region8: #{tpu_custom_call.1} parent=1 // loop_exit
      _
    %1468 = vsyncpa [#allocation3], 1
    %s1469 = scalar_lea.sflag [#allocation3], 1
    %1470 = vsyncpa %s1469, 1

</llo_original>
